<compile_context>
chip_gen: v7x
topology: tpu7x:2x2x1
jax: 0.10.0
libtpu: 0.0.40
codegen_flags: <defaults>
</compile_context>

<pallas_src>
import jax
import jax.numpy as jnp
from jax import lax
from jax.experimental import pallas as pl
from jax.experimental.pallas import tpu as pltpu

UNIT = 20            # self.unit_size
HID = 36             # self.hidden_size
INP = UNIT * 4       # LSTM input_size = 80
FC1 = 16

GBLK = 128           # lane-padded per-gate block width
NGATES = 4
GW = NGATES * GBLK   # 512: packed gate width (i | f | o | g)
BP = 8               # recurrence batch padded to f32 sublane count
HP = 128             # lane-padded hidden width

# ---- slab A (wide, 512 lanes) row layout: Whh + fused bias ------------------
_A_WHH = 0           # rows   0:128  (real rows 0:36, rest zero)
_A_BG = 128          # row  128      (fused b_ih + b_hh)
A_ROWS = 136

# ---- slab B (narrow, 128 lanes) row layout: h0, c0, fc1, fc2 ----------------
_B_H0 = 0            # rows   0:8
_B_C0 = 8            # rows   8:16
_B_W1 = 16           # rows  16:144  (real rows 0:36, cols 0:16)
_B_W2 = 144          # rows 144:272  (real rows 0:16, cols 0:n_classes)
_B_B1 = 272          # row  272
_B_B2 = 273          # row  273
B_ROWS = 280


def _lstm_head_kernel(x_ref, wih_ref, pa_ref, pb_ref, out_ref):
    """Packed-gate LSTM recurrence + fc1/relu + fc2 in one invocation.

    x_ref:   (S*8, INP)  time-major, batch padded to 8 rows
    wih_ref: (INP, 512)  lane-padded gate blocks (i|f|o|g), g cols pre-scaled x2
    pa_ref:  (136, 512)  [Whh (128 rows) | fused bias (1 row)]
    pb_ref:  (280, 128)  [h0 | c0 | W1 | W2 | b1 | b2]  lane-padded
    out_ref: (8, 128)    lane-dense output slab; real (B, C) sliced by wrapper
    """
    S = x_ref.shape[0] // BP

    # ---- input projection hoisted out of the recurrence: ONE matmul --------
    bg = pa_ref[_A_BG:_A_BG + 1, :]                               # (1, 512)
    xw = jnp.dot(x_ref[...].astype(jnp.bfloat16),
                 wih_ref[...].astype(jnp.bfloat16),
                 preferred_element_type=jnp.float32) + bg         # (S*8, 512)

    # ---- loop-invariant loads hoisted (Whh stays resident across steps) ----
    whh = pa_ref[_A_WHH:_A_WHH + HP, :].astype(jnp.bfloat16)      # (128, 512)
    h = pb_ref[_B_H0:_B_H0 + BP, :]                               # (8, 128) f32
    c = pb_ref[_B_C0:_B_C0 + BP, :]                               # (8, 128) f32

    # ---- fully unrolled recurrence; every operand is (8,128)-granular ------
    for t in range(S):
        z = xw[t * BP:(t + 1) * BP, :] + jnp.dot(
            h.astype(jnp.bfloat16), whh,
            preferred_element_type=jnp.float32)                   # (8, 512)
        s = jax.nn.sigmoid(z)                 # ONE full-width EUP dispatch
        i_g = s[:, 0 * GBLK:1 * GBLK]
        f_g = s[:, 1 * GBLK:2 * GBLK]
        o_g = s[:, 2 * GBLK:3 * GBLK]
        g_g = 2.0 * s[:, 3 * GBLK:4 * GBLK] - 1.0   # tanh(x) = 2*sigmoid(2x)-1
        c = f_g * c + i_g * g_g
        h = o_g * jnp.tanh(c)                 # elementwise stays f32 (v5e-safe)

    # ---- head: fc1 -> relu -> fc2 on the last hidden state (lane-padded) ---
    w1 = pb_ref[_B_W1:_B_W1 + HP, :]                              # (128, 128)
    w2 = pb_ref[_B_W2:_B_W2 + HP, :]                              # (128, 128)
    b1 = pb_ref[_B_B1:_B_B1 + 1, :]                               # (1, 128)
    b2 = pb_ref[_B_B2:_B_B2 + 1, :]                               # (1, 128)
    z1 = jnp.maximum(jnp.dot(h, w1, preferred_element_type=jnp.float32) + b1,
                     0.0)
    out_ref[...] = (jnp.dot(z1, w2, preferred_element_type=jnp.float32) + b2
                    ).astype(out_ref.dtype)


def pack_params_for_kernel(params, h0, c0):
    """Lane-pad each gate to its own 128-lane block in order (i, f, o, g).

    The g block is pre-scaled by 2 so the kernel can use one full-width
    sigmoid and recover tanh with a VPU fix-up.  All small tensors are packed
    into two slabs so the kernel takes 4 input DMAs instead of 10.
    """
    order = (0, 1, 3, 2)           # torch gate rows are (i, f, g, o)
    scale = (1.0, 1.0, 1.0, 2.0)   # slot 3 holds g -> pre-scale by 2

    def pack_gates(per_gate, lead):
        out = jnp.zeros((lead, GW), jnp.float32)
        for slot, k in enumerate(order):
            out = out.at[:, slot * GBLK: slot * GBLK + HID].set(
                scale[slot] * per_gate[k])
        return out

    wih_p = pack_gates(params["wih"], INP)      # (80, 512)
    whh_p = pack_gates(params["whh"], HID)      # (36, 512)
    bg_p = pack_gates(params["bg"], 1)          # (1, 512)

    slab_a = jnp.zeros((A_ROWS, GW), jnp.float32)
    slab_a = slab_a.at[_A_WHH:_A_WHH + HID, :].set(whh_p)
    slab_a = slab_a.at[_A_BG, :].set(bg_p[0])

    B = h0.shape[0]
    n_classes = params["w2"].shape[1]
    slab_b = jnp.zeros((B_ROWS, HP), jnp.float32)
    slab_b = slab_b.at[_B_H0:_B_H0 + B, :HID].set(h0)
    slab_b = slab_b.at[_B_C0:_B_C0 + B, :HID].set(c0)
    slab_b = slab_b.at[_B_W1:_B_W1 + HID, :FC1].set(params["w1"])
    slab_b = slab_b.at[_B_W2:_B_W2 + FC1, :n_classes].set(params["w2"])
    slab_b = slab_b.at[_B_B1, :FC1].set(params["b1"][0])
    slab_b = slab_b.at[_B_B2, :n_classes].set(params["b2"][0])
    return wih_p, slab_a, slab_b


def lstm_classifier_forward(x, params, h0, c0):
    """Glue: trimming / reshape / permute / padding in plain JAX, hot path in Pallas."""
    B = x.shape[0]
    assert B <= BP, "TODO(synk): batch > 8 needs a leading batch grid"
    T = x.shape[-1]
    r = T % UNIT
    if r > 0:
        x = x[:, :, :T - r]
    x = x.reshape(B, 4, -1, UNIT)             # (B, 4, S, 20)
    x = jnp.transpose(x, (0, 2, 1, 3))        # (B, S, 4, 20)
    S = x.shape[1]
    x = x.reshape(B, S, INP).astype(jnp.float32)

    # time-major, batch padded to 8 rows so each per-step slice in the kernel
    # is a full sublane-aligned (8, 512) tile; flattened to 2-D for ONE
    # hoisted input-projection matmul.
    xt = jnp.transpose(x, (1, 0, 2))                              # (S, B, I)
    xt = jnp.pad(xt, ((0, 0), (0, BP - B), (0, 0)))               # (S, 8, I)
    x2d = xt.reshape(S * BP, INP)

    wih_p, slab_a, slab_b = pack_params_for_kernel(
        params, h0.astype(jnp.float32), c0.astype(jnp.float32))
    n_classes = params["w2"].shape[1]

    vmem = pl.BlockSpec(memory_space=pltpu.MemorySpace.VMEM)
    out = pl.pallas_call(
        _lstm_head_kernel,
        out_shape=jax.ShapeDtypeStruct((BP, HP), jnp.float32),
        in_specs=[vmem] * 4,
        out_specs=vmem,
    )(x2d, wih_p, slab_a, slab_b)
    return out[:B, :n_classes]


def _reference_forward(x, params, h0, c0):
    """Pure-JAX f32 reference (same math, unpacked gates) for correctness."""
    B = x.shape[0]
    T = x.shape[-1]
    r = T % UNIT
    if r > 0:
        x = x[:, :, :T - r]
    x = x.reshape(B, 4, -1, UNIT)
    x = jnp.transpose(x, (0, 2, 1, 3)).reshape(B, -1, INP).astype(jnp.float32)

    def cell(carry, xt):
        h, c = carry

        def gate(k):
            return xt @ params["wih"][k] + h @ params["whh"][k] + params["bg"][k]

        i_g = jax.nn.sigmoid(gate(0))
        f_g = jax.nn.sigmoid(gate(1))
        g_g = jnp.tanh(gate(2))
        o_g = jax.nn.sigmoid(gate(3))
        c_new = f_g * c + i_g * g_g
        h_new = o_g * jnp.tanh(c_new)
        return (h_new, c_new), None

    (h_last, _), _ = lax.scan(cell, (h0, c0), jnp.transpose(x, (1, 0, 2)))
    z1 = jnp.maximum(h_last @ params["w1"] + params["b1"], 0.0)
    return z1 @ params["w2"] + params["b2"]


def init_params(key, n_classes):
    ks = jax.random.split(key, 8)
    b = 1.0 / float(jnp.sqrt(HID))
    wih = jax.random.uniform(ks[0], (4, INP, HID), jnp.float32, -b, b)
    whh = jax.random.uniform(ks[1], (4, HID, HID), jnp.float32, -b, b)
    b_ih = jax.random.uniform(ks[2], (4, 1, HID), jnp.float32, -b, b)
    b_hh = jax.random.uniform(ks[3], (4, 1, HID), jnp.float32, -b, b)
    b1b = 1.0 / float(jnp.sqrt(HID))
    w1 = jax.random.uniform(ks[4], (HID, FC1), jnp.float32, -b1b, b1b)
    b1 = jax.random.uniform(ks[5], (1, FC1), jnp.float32, -b1b, b1b)
    b2b = 1.0 / float(jnp.sqrt(FC1))
    w2 = jax.random.uniform(ks[6], (FC1, n_classes), jnp.float32, -b2b, b2b)
    b2 = jax.random.uniform(ks[7], (1, n_classes), jnp.float32, -b2b, b2b)
    return dict(wih=wih, whh=whh, bg=b_ih + b_hh, w1=w1, b1=b1, w2=w2, b2=b2)


if __name__ == "__main__":
    key = jax.random.PRNGKey(0)
    k_x, k_h, k_c, k_p = jax.random.split(key, 4)

    B, C_IN, T = 2, 4, 165          # 165 % 20 == 5 -> exercises the trim path; S = 8
    N_CLASSES = 3

    x = jax.random.normal(k_x, (B, C_IN, T), dtype=jnp.float32)
    h0 = jax.random.normal(k_h, (B, HID), dtype=jnp.float32)   # torch h0 (1,B,H) squeezed
    c0 = jax.random.normal(k_c, (B, HID), dtype=jnp.float32)
    params = init_params(k_p, N_CLASSES)

    out = lstm_classifier_forward(x, params, h0, c0)
    out = jax.block_until_ready(out)

    ref = _reference_forward(x, params, h0, c0)
    assert out.shape == (B, N_CLASSES)
    # bf16 MXU passes on the recurrence -> loosened tolerance vs f32 reference.
    assert jnp.allclose(out, ref, rtol=3e-2, atol=3e-2), (out, ref)

    print("KERNEL_OK")
</pallas_src>

<mosaic_0001>
module attributes {stable_mosaic.version = 11 : i64} {
  func.func @_lstm_head_kernel(%arg0: memref<64x80xf32, #tpu.memory_space<vmem>>, %arg1: memref<80x512xf32, #tpu.memory_space<vmem>>, %arg2: memref<136x512xf32, #tpu.memory_space<vmem>>, %arg3: memref<280x128xf32, #tpu.memory_space<vmem>>, %arg4: memref<8x128xf32, #tpu.memory_space<vmem>>) attributes {dimension_semantics = [], scalar_prefetch = 0 : i64, scratch_operands = 0 : i64, tpu.core_type = #tpu.core_type<tc>} {
    %c128 = arith.constant 128 : index
    %c0 = arith.constant 0 : index
    %0 = vector.load %arg2[%c128, %c0] : memref<136x512xf32, #tpu.memory_space<vmem>>, vector<1x512xf32>
    %c0_0 = arith.constant 0 : index
    %c0_1 = arith.constant 0 : index
    %1 = vector.load %arg0[%c0_0, %c0_1] : memref<64x80xf32, #tpu.memory_space<vmem>>, vector<64x80xf32>
    %2 = arith.truncf %1 : vector<64x80xf32> to vector<64x80xbf16>
    %c0_2 = arith.constant 0 : index
    %c0_3 = arith.constant 0 : index
    %3 = vector.load %arg1[%c0_2, %c0_3] : memref<80x512xf32, #tpu.memory_space<vmem>>, vector<80x512xf32>
    %4 = arith.truncf %3 : vector<80x512xf32> to vector<80x512xbf16>
    %cst = arith.constant dense<0.000000e+00> : vector<64x512xf32>
    %5 = tpu.matmul %2, %4, %cst {dimension_numbers = #tpu.dot_dimension_numbers<[1], [0], [0], [1], [0, 0, 1, 1], [], []>} : vector<64x80xbf16>, vector<80x512xbf16>, vector<64x512xf32> -> vector<64x512xf32>
    %6 = vector.broadcast %0 : vector<1x512xf32> to vector<64x512xf32>
    %7 = arith.addf %5, %6 : vector<64x512xf32>
    %c0_4 = arith.constant 0 : index
    %c0_5 = arith.constant 0 : index
    %8 = vector.load %arg2[%c0_4, %c0_5] : memref<136x512xf32, #tpu.memory_space<vmem>>, vector<128x512xf32>
    %9 = arith.truncf %8 : vector<128x512xf32> to vector<128x512xbf16>
    %c0_6 = arith.constant 0 : index
    %c0_7 = arith.constant 0 : index
    %10 = vector.load %arg3[%c0_6, %c0_7] : memref<280x128xf32, #tpu.memory_space<vmem>>, vector<8x128xf32>
    %c8 = arith.constant 8 : index
    %c0_8 = arith.constant 0 : index
    %11 = vector.load %arg3[%c8, %c0_8] : memref<280x128xf32, #tpu.memory_space<vmem>>, vector<8x128xf32>
    %12 = vector.extract_strided_slice %7 {offsets = [0, 0], sizes = [8, 512], strides = [1, 1]} : vector<64x512xf32> to vector<8x512xf32>
    %13 = arith.truncf %10 : vector<8x128xf32> to vector<8x128xbf16>
    %cst_9 = arith.constant dense<0.000000e+00> : vector<8x512xf32>
    %14 = tpu.matmul %13, %9, %cst_9 {dimension_numbers = #tpu.dot_dimension_numbers<[1], [0], [0], [1], [0, 0, 1, 1], [], []>} : vector<8x128xbf16>, vector<128x512xbf16>, vector<8x512xf32> -> vector<8x512xf32>
    %15 = arith.addf %12, %14 : vector<8x512xf32>
    %16 = arith.negf %15 : vector<8x512xf32>
    %17 = math.exp %16 : vector<8x512xf32>
    %cst_10 = arith.constant 1.000000e+00 : f32
    %18 = vector.broadcast %cst_10 : f32 to vector<8x512xf32>
    %19 = arith.addf %18, %17 : vector<8x512xf32>
    %20 = arith.divf %18, %19 : vector<8x512xf32>
    %21 = vector.extract_strided_slice %20 {offsets = [0, 0], sizes = [8, 128], strides = [1, 1]} : vector<8x512xf32> to vector<8x128xf32>
    %22 = vector.extract_strided_slice %20 {offsets = [0, 128], sizes = [8, 128], strides = [1, 1]} : vector<8x512xf32> to vector<8x128xf32>
    %23 = vector.extract_strided_slice %20 {offsets = [0, 256], sizes = [8, 128], strides = [1, 1]} : vector<8x512xf32> to vector<8x128xf32>
    %24 = vector.extract_strided_slice %20 {offsets = [0, 384], sizes = [8, 128], strides = [1, 1]} : vector<8x512xf32> to vector<8x128xf32>
    %cst_11 = arith.constant 2.000000e+00 : f32
    %25 = vector.broadcast %cst_11 : f32 to vector<8x128xf32>
    %26 = arith.mulf %25, %24 : vector<8x128xf32>
    %cst_12 = arith.constant 1.000000e+00 : f32
    %27 = vector.broadcast %cst_12 : f32 to vector<8x128xf32>
    %28 = arith.subf %26, %27 : vector<8x128xf32>
    %29 = arith.mulf %22, %11 : vector<8x128xf32>
    %30 = arith.mulf %21, %28 : vector<8x128xf32>
    %31 = arith.addf %29, %30 : vector<8x128xf32>
    %32 = math.tanh %31 : vector<8x128xf32>
    %33 = arith.mulf %23, %32 : vector<8x128xf32>
    %34 = vector.extract_strided_slice %7 {offsets = [8, 0], sizes = [8, 512], strides = [1, 1]} : vector<64x512xf32> to vector<8x512xf32>
    %35 = arith.truncf %33 : vector<8x128xf32> to vector<8x128xbf16>
    %cst_13 = arith.constant dense<0.000000e+00> : vector<8x512xf32>
    %36 = tpu.matmul %35, %9, %cst_13 {dimension_numbers = #tpu.dot_dimension_numbers<[1], [0], [0], [1], [0, 0, 1, 1], [], []>} : vector<8x128xbf16>, vector<128x512xbf16>, vector<8x512xf32> -> vector<8x512xf32>
    %37 = arith.addf %34, %36 : vector<8x512xf32>
    %38 = arith.negf %37 : vector<8x512xf32>
    %39 = math.exp %38 : vector<8x512xf32>
    %cst_14 = arith.constant 1.000000e+00 : f32
    %40 = vector.broadcast %cst_14 : f32 to vector<8x512xf32>
    %41 = arith.addf %40, %39 : vector<8x512xf32>
    %42 = arith.divf %40, %41 : vector<8x512xf32>
    %43 = vector.extract_strided_slice %42 {offsets = [0, 0], sizes = [8, 128], strides = [1, 1]} : vector<8x512xf32> to vector<8x128xf32>
    %44 = vector.extract_strided_slice %42 {offsets = [0, 128], sizes = [8, 128], strides = [1, 1]} : vector<8x512xf32> to vector<8x128xf32>
    %45 = vector.extract_strided_slice %42 {offsets = [0, 256], sizes = [8, 128], strides = [1, 1]} : vector<8x512xf32> to vector<8x128xf32>
    %46 = vector.extract_strided_slice %42 {offsets = [0, 384], sizes = [8, 128], strides = [1, 1]} : vector<8x512xf32> to vector<8x128xf32>
    %cst_15 = arith.constant 2.000000e+00 : f32
    %47 = vector.broadcast %cst_15 : f32 to vector<8x128xf32>
    %48 = arith.mulf %47, %46 : vector<8x128xf32>
    %cst_16 = arith.constant 1.000000e+00 : f32
    %49 = vector.broadcast %cst_16 : f32 to vector<8x128xf32>
    %50 = arith.subf %48, %49 : vector<8x128xf32>
    %51 = arith.mulf %44, %31 : vector<8x128xf32>
    %52 = arith.mulf %43, %50 : vector<8x128xf32>
    %53 = arith.addf %51, %52 : vector<8x128xf32>
    %54 = math.tanh %53 : vector<8x128xf32>
    %55 = arith.mulf %45, %54 : vector<8x128xf32>
    %56 = vector.extract_strided_slice %7 {offsets = [16, 0], sizes = [8, 512], strides = [1, 1]} : vector<64x512xf32> to vector<8x512xf32>
    %57 = arith.truncf %55 : vector<8x128xf32> to vector<8x128xbf16>
    %cst_17 = arith.constant dense<0.000000e+00> : vector<8x512xf32>
    %58 = tpu.matmul %57, %9, %cst_17 {dimension_numbers = #tpu.dot_dimension_numbers<[1], [0], [0], [1], [0, 0, 1, 1], [], []>} : vector<8x128xbf16>, vector<128x512xbf16>, vector<8x512xf32> -> vector<8x512xf32>
    %59 = arith.addf %56, %58 : vector<8x512xf32>
    %60 = arith.negf %59 : vector<8x512xf32>
    %61 = math.exp %60 : vector<8x512xf32>
    %cst_18 = arith.constant 1.000000e+00 : f32
    %62 = vector.broadcast %cst_18 : f32 to vector<8x512xf32>
    %63 = arith.addf %62, %61 : vector<8x512xf32>
    %64 = arith.divf %62, %63 : vector<8x512xf32>
    %65 = vector.extract_strided_slice %64 {offsets = [0, 0], sizes = [8, 128], strides = [1, 1]} : vector<8x512xf32> to vector<8x128xf32>
    %66 = vector.extract_strided_slice %64 {offsets = [0, 128], sizes = [8, 128], strides = [1, 1]} : vector<8x512xf32> to vector<8x128xf32>
    %67 = vector.extract_strided_slice %64 {offsets = [0, 256], sizes = [8, 128], strides = [1, 1]} : vector<8x512xf32> to vector<8x128xf32>
    %68 = vector.extract_strided_slice %64 {offsets = [0, 384], sizes = [8, 128], strides = [1, 1]} : vector<8x512xf32> to vector<8x128xf32>
    %cst_19 = arith.constant 2.000000e+00 : f32
    %69 = vector.broadcast %cst_19 : f32 to vector<8x128xf32>
    %70 = arith.mulf %69, %68 : vector<8x128xf32>
    %cst_20 = arith.constant 1.000000e+00 : f32
    %71 = vector.broadcast %cst_20 : f32 to vector<8x128xf32>
    %72 = arith.subf %70, %71 : vector<8x128xf32>
    %73 = arith.mulf %66, %53 : vector<8x128xf32>
    %74 = arith.mulf %65, %72 : vector<8x128xf32>
    %75 = arith.addf %73, %74 : vector<8x128xf32>
    %76 = math.tanh %75 : vector<8x128xf32>
    %77 = arith.mulf %67, %76 : vector<8x128xf32>
    %78 = vector.extract_strided_slice %7 {offsets = [24, 0], sizes = [8, 512], strides = [1, 1]} : vector<64x512xf32> to vector<8x512xf32>
    %79 = arith.truncf %77 : vector<8x128xf32> to vector<8x128xbf16>
    %cst_21 = arith.constant dense<0.000000e+00> : vector<8x512xf32>
    %80 = tpu.matmul %79, %9, %cst_21 {dimension_numbers = #tpu.dot_dimension_numbers<[1], [0], [0], [1], [0, 0, 1, 1], [], []>} : vector<8x128xbf16>, vector<128x512xbf16>, vector<8x512xf32> -> vector<8x512xf32>
    %81 = arith.addf %78, %80 : vector<8x512xf32>
    %82 = arith.negf %81 : vector<8x512xf32>
    %83 = math.exp %82 : vector<8x512xf32>
    %cst_22 = arith.constant 1.000000e+00 : f32
    %84 = vector.broadcast %cst_22 : f32 to vector<8x512xf32>
    %85 = arith.addf %84, %83 : vector<8x512xf32>
    %86 = arith.divf %84, %85 : vector<8x512xf32>
    %87 = vector.extract_strided_slice %86 {offsets = [0, 0], sizes = [8, 128], strides = [1, 1]} : vector<8x512xf32> to vector<8x128xf32>
    %88 = vector.extract_strided_slice %86 {offsets = [0, 128], sizes = [8, 128], strides = [1, 1]} : vector<8x512xf32> to vector<8x128xf32>
    %89 = vector.extract_strided_slice %86 {offsets = [0, 256], sizes = [8, 128], strides = [1, 1]} : vector<8x512xf32> to vector<8x128xf32>
    %90 = vector.extract_strided_slice %86 {offsets = [0, 384], sizes = [8, 128], strides = [1, 1]} : vector<8x512xf32> to vector<8x128xf32>
    %cst_23 = arith.constant 2.000000e+00 : f32
    %91 = vector.broadcast %cst_23 : f32 to vector<8x128xf32>
    %92 = arith.mulf %91, %90 : vector<8x128xf32>
    %cst_24 = arith.constant 1.000000e+00 : f32
    %93 = vector.broadcast %cst_24 : f32 to vector<8x128xf32>
    %94 = arith.subf %92, %93 : vector<8x128xf32>
    %95 = arith.mulf %88, %75 : vector<8x128xf32>
    %96 = arith.mulf %87, %94 : vector<8x128xf32>
    %97 = arith.addf %95, %96 : vector<8x128xf32>
    %98 = math.tanh %97 : vector<8x128xf32>
    %99 = arith.mulf %89, %98 : vector<8x128xf32>
    %100 = vector.extract_strided_slice %7 {offsets = [32, 0], sizes = [8, 512], strides = [1, 1]} : vector<64x512xf32> to vector<8x512xf32>
    %101 = arith.truncf %99 : vector<8x128xf32> to vector<8x128xbf16>
    %cst_25 = arith.constant dense<0.000000e+00> : vector<8x512xf32>
    %102 = tpu.matmul %101, %9, %cst_25 {dimension_numbers = #tpu.dot_dimension_numbers<[1], [0], [0], [1], [0, 0, 1, 1], [], []>} : vector<8x128xbf16>, vector<128x512xbf16>, vector<8x512xf32> -> vector<8x512xf32>
    %103 = arith.addf %100, %102 : vector<8x512xf32>
    %104 = arith.negf %103 : vector<8x512xf32>
    %105 = math.exp %104 : vector<8x512xf32>
    %cst_26 = arith.constant 1.000000e+00 : f32
    %106 = vector.broadcast %cst_26 : f32 to vector<8x512xf32>
    %107 = arith.addf %106, %105 : vector<8x512xf32>
    %108 = arith.divf %106, %107 : vector<8x512xf32>
    %109 = vector.extract_strided_slice %108 {offsets = [0, 0], sizes = [8, 128], strides = [1, 1]} : vector<8x512xf32> to vector<8x128xf32>
    %110 = vector.extract_strided_slice %108 {offsets = [0, 128], sizes = [8, 128], strides = [1, 1]} : vector<8x512xf32> to vector<8x128xf32>
    %111 = vector.extract_strided_slice %108 {offsets = [0, 256], sizes = [8, 128], strides = [1, 1]} : vector<8x512xf32> to vector<8x128xf32>
    %112 = vector.extract_strided_slice %108 {offsets = [0, 384], sizes = [8, 128], strides = [1, 1]} : vector<8x512xf32> to vector<8x128xf32>
    %cst_27 = arith.constant 2.000000e+00 : f32
    %113 = vector.broadcast %cst_27 : f32 to vector<8x128xf32>
    %114 = arith.mulf %113, %112 : vector<8x128xf32>
    %cst_28 = arith.constant 1.000000e+00 : f32
    %115 = vector.broadcast %cst_28 : f32 to vector<8x128xf32>
    %116 = arith.subf %114, %115 : vector<8x128xf32>
    %117 = arith.mulf %110, %97 : vector<8x128xf32>
    %118 = arith.mulf %109, %116 : vector<8x128xf32>
    %119 = arith.addf %117, %118 : vector<8x128xf32>
    %120 = math.tanh %119 : vector<8x128xf32>
    %121 = arith.mulf %111, %120 : vector<8x128xf32>
    %122 = vector.extract_strided_slice %7 {offsets = [40, 0], sizes = [8, 512], strides = [1, 1]} : vector<64x512xf32> to vector<8x512xf32>
    %123 = arith.truncf %121 : vector<8x128xf32> to vector<8x128xbf16>
    %cst_29 = arith.constant dense<0.000000e+00> : vector<8x512xf32>
    %124 = tpu.matmul %123, %9, %cst_29 {dimension_numbers = #tpu.dot_dimension_numbers<[1], [0], [0], [1], [0, 0, 1, 1], [], []>} : vector<8x128xbf16>, vector<128x512xbf16>, vector<8x512xf32> -> vector<8x512xf32>
    %125 = arith.addf %122, %124 : vector<8x512xf32>
    %126 = arith.negf %125 : vector<8x512xf32>
    %127 = math.exp %126 : vector<8x512xf32>
    %cst_30 = arith.constant 1.000000e+00 : f32
    %128 = vector.broadcast %cst_30 : f32 to vector<8x512xf32>
    %129 = arith.addf %128, %127 : vector<8x512xf32>
    %130 = arith.divf %128, %129 : vector<8x512xf32>
    %131 = vector.extract_strided_slice %130 {offsets = [0, 0], sizes = [8, 128], strides = [1, 1]} : vector<8x512xf32> to vector<8x128xf32>
    %132 = vector.extract_strided_slice %130 {offsets = [0, 128], sizes = [8, 128], strides = [1, 1]} : vector<8x512xf32> to vector<8x128xf32>
    %133 = vector.extract_strided_slice %130 {offsets = [0, 256], sizes = [8, 128], strides = [1, 1]} : vector<8x512xf32> to vector<8x128xf32>
    %134 = vector.extract_strided_slice %130 {offsets = [0, 384], sizes = [8, 128], strides = [1, 1]} : vector<8x512xf32> to vector<8x128xf32>
    %cst_31 = arith.constant 2.000000e+00 : f32
    %135 = vector.broadcast %cst_31 : f32 to vector<8x128xf32>
    %136 = arith.mulf %135, %134 : vector<8x128xf32>
    %cst_32 = arith.constant 1.000000e+00 : f32
    %137 = vector.broadcast %cst_32 : f32 to vector<8x128xf32>
    %138 = arith.subf %136, %137 : vector<8x128xf32>
    %139 = arith.mulf %132, %119 : vector<8x128xf32>
    %140 = arith.mulf %131, %138 : vector<8x128xf32>
    %141 = arith.addf %139, %140 : vector<8x128xf32>
    %142 = math.tanh %141 : vector<8x128xf32>
    %143 = arith.mulf %133, %142 : vector<8x128xf32>
    %144 = vector.extract_strided_slice %7 {offsets = [48, 0], sizes = [8, 512], strides = [1, 1]} : vector<64x512xf32> to vector<8x512xf32>
    %145 = arith.truncf %143 : vector<8x128xf32> to vector<8x128xbf16>
    %cst_33 = arith.constant dense<0.000000e+00> : vector<8x512xf32>
    %146 = tpu.matmul %145, %9, %cst_33 {dimension_numbers = #tpu.dot_dimension_numbers<[1], [0], [0], [1], [0, 0, 1, 1], [], []>} : vector<8x128xbf16>, vector<128x512xbf16>, vector<8x512xf32> -> vector<8x512xf32>
    %147 = arith.addf %144, %146 : vector<8x512xf32>
    %148 = arith.negf %147 : vector<8x512xf32>
    %149 = math.exp %148 : vector<8x512xf32>
    %cst_34 = arith.constant 1.000000e+00 : f32
    %150 = vector.broadcast %cst_34 : f32 to vector<8x512xf32>
    %151 = arith.addf %150, %149 : vector<8x512xf32>
    %152 = arith.divf %150, %151 : vector<8x512xf32>
    %153 = vector.extract_strided_slice %152 {offsets = [0, 0], sizes = [8, 128], strides = [1, 1]} : vector<8x512xf32> to vector<8x128xf32>
    %154 = vector.extract_strided_slice %152 {offsets = [0, 128], sizes = [8, 128], strides = [1, 1]} : vector<8x512xf32> to vector<8x128xf32>
    %155 = vector.extract_strided_slice %152 {offsets = [0, 256], sizes = [8, 128], strides = [1, 1]} : vector<8x512xf32> to vector<8x128xf32>
    %156 = vector.extract_strided_slice %152 {offsets = [0, 384], sizes = [8, 128], strides = [1, 1]} : vector<8x512xf32> to vector<8x128xf32>
    %cst_35 = arith.constant 2.000000e+00 : f32
    %157 = vector.broadcast %cst_35 : f32 to vector<8x128xf32>
    %158 = arith.mulf %157, %156 : vector<8x128xf32>
    %cst_36 = arith.constant 1.000000e+00 : f32
    %159 = vector.broadcast %cst_36 : f32 to vector<8x128xf32>
    %160 = arith.subf %158, %159 : vector<8x128xf32>
    %161 = arith.mulf %154, %141 : vector<8x128xf32>
    %162 = arith.mulf %153, %160 : vector<8x128xf32>
    %163 = arith.addf %161, %162 : vector<8x128xf32>
    %164 = math.tanh %163 : vector<8x128xf32>
    %165 = arith.mulf %155, %164 : vector<8x128xf32>
    %166 = vector.extract_strided_slice %7 {offsets = [56, 0], sizes = [8, 512], strides = [1, 1]} : vector<64x512xf32> to vector<8x512xf32>
    %167 = arith.truncf %165 : vector<8x128xf32> to vector<8x128xbf16>
    %cst_37 = arith.constant dense<0.000000e+00> : vector<8x512xf32>
    %168 = tpu.matmul %167, %9, %cst_37 {dimension_numbers = #tpu.dot_dimension_numbers<[1], [0], [0], [1], [0, 0, 1, 1], [], []>} : vector<8x128xbf16>, vector<128x512xbf16>, vector<8x512xf32> -> vector<8x512xf32>
    %169 = arith.addf %166, %168 : vector<8x512xf32>
    %170 = arith.negf %169 : vector<8x512xf32>
    %171 = math.exp %170 : vector<8x512xf32>
    %cst_38 = arith.constant 1.000000e+00 : f32
    %172 = vector.broadcast %cst_38 : f32 to vector<8x512xf32>
    %173 = arith.addf %172, %171 : vector<8x512xf32>
    %174 = arith.divf %172, %173 : vector<8x512xf32>
    %175 = vector.extract_strided_slice %174 {offsets = [0, 0], sizes = [8, 128], strides = [1, 1]} : vector<8x512xf32> to vector<8x128xf32>
    %176 = vector.extract_strided_slice %174 {offsets = [0, 128], sizes = [8, 128], strides = [1, 1]} : vector<8x512xf32> to vector<8x128xf32>
    %177 = vector.extract_strided_slice %174 {offsets = [0, 256], sizes = [8, 128], strides = [1, 1]} : vector<8x512xf32> to vector<8x128xf32>
    %178 = vector.extract_strided_slice %174 {offsets = [0, 384], sizes = [8, 128], strides = [1, 1]} : vector<8x512xf32> to vector<8x128xf32>
    %cst_39 = arith.constant 2.000000e+00 : f32
    %179 = vector.broadcast %cst_39 : f32 to vector<8x128xf32>
    %180 = arith.mulf %179, %178 : vector<8x128xf32>
    %cst_40 = arith.constant 1.000000e+00 : f32
    %181 = vector.broadcast %cst_40 : f32 to vector<8x128xf32>
    %182 = arith.subf %180, %181 : vector<8x128xf32>
    %183 = arith.mulf %176, %163 : vector<8x128xf32>
    %184 = arith.mulf %175, %182 : vector<8x128xf32>
    %185 = arith.addf %183, %184 : vector<8x128xf32>
    %186 = math.tanh %185 : vector<8x128xf32>
    %187 = arith.mulf %177, %186 : vector<8x128xf32>
    %c16 = arith.constant 16 : index
    %c0_41 = arith.constant 0 : index
    %188 = vector.load %arg3[%c16, %c0_41] : memref<280x128xf32, #tpu.memory_space<vmem>>, vector<128x128xf32>
    %c144 = arith.constant 144 : index
    %c0_42 = arith.constant 0 : index
    %189 = vector.load %arg3[%c144, %c0_42] : memref<280x128xf32, #tpu.memory_space<vmem>>, vector<128x128xf32>
    %c272 = arith.constant 272 : index
    %c0_43 = arith.constant 0 : index
    %190 = vector.load %arg3[%c272, %c0_43] : memref<280x128xf32, #tpu.memory_space<vmem>>, vector<1x128xf32>
    %c273 = arith.constant 273 : index
    %c0_44 = arith.constant 0 : index
    %191 = vector.load %arg3[%c273, %c0_44] : memref<280x128xf32, #tpu.memory_space<vmem>>, vector<1x128xf32>
    %cst_45 = arith.constant dense<0.000000e+00> : vector<8x128xf32>
    %192 = tpu.matmul %187, %188, %cst_45 {dimension_numbers = #tpu.dot_dimension_numbers<[1], [0], [0], [1], [0, 0, 1, 1], [], []>} : vector<8x128xf32>, vector<128x128xf32>, vector<8x128xf32> -> vector<8x128xf32>
    %193 = vector.broadcast %190 : vector<1x128xf32> to vector<8x128xf32>
    %194 = arith.addf %192, %193 : vector<8x128xf32>
    %cst_46 = arith.constant 0.000000e+00 : f32
    %195 = vector.broadcast %cst_46 : f32 to vector<8x128xf32>
    %196 = arith.maximumf %194, %195 : vector<8x128xf32>
    %cst_47 = arith.constant dense<0.000000e+00> : vector<8x128xf32>
    %197 = tpu.matmul %196, %189, %cst_47 {dimension_numbers = #tpu.dot_dimension_numbers<[1], [0], [0], [1], [0, 0, 1, 1], [], []>} : vector<8x128xf32>, vector<128x128xf32>, vector<8x128xf32> -> vector<8x128xf32>
    %198 = vector.broadcast %191 : vector<1x128xf32> to vector<8x128xf32>
    %199 = arith.addf %197, %198 : vector<8x128xf32>
    %c0_48 = arith.constant 0 : index
    %c0_49 = arith.constant 0 : index
    %200 = vector.load %arg4[%c0_48, %c0_49] : memref<8x128xf32, #tpu.memory_space<vmem>>, vector<8x128xf32>
    tpu.vector_store %arg4[%c0_48, %c0_49], %199 {strides = array<i32>} : memref<8x128xf32, #tpu.memory_space<vmem>>, vector<8x128xf32>,
    return
  }
}

</mosaic_0001>

<llo_original>
// kernel: tpu_custom_call.1
$region0: #{tpu_custom_call.1}
  #allocation0 [shape = 'u32[]', space=smem, size = 0x4, offset = 0x4, fixed_abs, tag = 'smem constant byte address 0x4 - core index']
  #allocation1 [shape = 'u32[144,128]{1,0:T(1,128)}', space=vmem, size = 0x12000, scoped, tag = 'internal scratch']
  %s0 = inlined_call_operand.hbm [shape: f32[64,80], index: 0, kind: input, shape index: {}]
  %s1 = inlined_call_operand.hbm [shape: f32[80,512], index: 1, kind: input, shape index: {}]
  %s2 = inlined_call_operand.hbm [shape: f32[136,512], index: 2, kind: input, shape index: {}]
  %s3 = inlined_call_operand.hbm [shape: f32[280,128], index: 3, kind: input, shape index: {}]
  %s4 = inlined_call_operand.hbm [shape: f32[8,128], index: 4, kind: output, shape index: {}]
  %s5 = sld [smem:[#allocation0]]
  $region42: #{tpu_custom_call.1} parent=0
    _
  %s7 = ssub.s32 1, %s5
  %s8 = scalar_select 0, %s7, %s5
  $region1: #{tpu_custom_call.1} parent=0
    #allocation2 [shape = 'u8[32768]{0}', space=vmem, size = 0x8000, scoped, tag = 'input window, operand 0, single buffered']
    #allocation3 [shape = 's32[1]{0}', space=sflag, size = 0x4, scoped, tag = 'scoped memory for tpu_custom_call.1']
    #allocation4 [shape = 's32[1]{0}', space=sflag, size = 0x4, scoped, tag = 'scoped memory for tpu_custom_call.1']
    #allocation5 [shape = 'u8[163840]{0}', space=vmem, size = 0x28000, scoped, tag = 'input window, operand 1, single buffered']
    #allocation6 [shape = 's32[1]{0}', space=sflag, size = 0x4, scoped, tag = 'scoped memory for tpu_custom_call.1']
    #allocation7 [shape = 'u8[278528]{0}', space=vmem, size = 0x44000, scoped, tag = 'input window, operand 2, single buffered']
    #allocation8 [shape = 'u8[143360]{0}', space=vmem, size = 0x23000, scoped, tag = 'input window, operand 3, single buffered']
    #allocation9 [shape = 's32[1]{0}', space=sflag, size = 0x4, scoped, tag = 'scoped memory for tpu_custom_call.1']
    #allocation10 [shape = 'u8[4096]{0}', space=vmem, size = 0x1000, scoped, tag = 'output window, operand 0, single buffered']
    %9 = vsyncpa [#allocation3], 0
    %10 = vsyncpa [#allocation6], 0
    %11 = vsyncpa [#allocation9], 0
    %12 = vsyncpa [#allocation4], 0
    // Predicated region
    $region2: #{tpu_custom_call.1} parent=1 // pred_check
      _
    $region3: #{tpu_custom_call.1} parent=1 // pred_check_branch
      %14 = sbr.rel (0) target = $region5
    $region4: #{tpu_custom_call.1} parent=1 // pred_region
      %s16 = ssub.s32 1024, 1024
      %17 = vsyncadd [#allocation3], %s16
      %s18 = sshll.u32 [#allocation2], 4
      %s19 = int_to_ptr.vmem [resolvable:$true] %s18
      %24 = dma.hbm_to_vmem [thread:$0]  %s0, 1024, %s19, [#allocation3], 128, 128, 8
    $region5: #{tpu_custom_call.1} parent=1 // pred_fallthru
      _
    // Predicated region
    $region6: #{tpu_custom_call.1} parent=1 // pred_check
      _
    $region7: #{tpu_custom_call.1} parent=1 // pred_check_branch
      %26 = sbr.rel (0) target = $region9
    $region8: #{tpu_custom_call.1} parent=1 // pred_region
      %s28 = ssub.s32 5120, 5120
      %29 = vsyncadd [#allocation6], %s28
      %s30 = sshll.u32 [#allocation5], 4
      %s31 = int_to_ptr.vmem [resolvable:$true] %s30
      %36 = dma.hbm_to_vmem [thread:$0]  %s1, 5120, %s31, [#allocation6], 512, 512, 32
    $region9: #{tpu_custom_call.1} parent=1 // pred_fallthru
      _
    // Predicated region
    $region10: #{tpu_custom_call.1} parent=1 // pred_check
      _
    $region11: #{tpu_custom_call.1} parent=1 // pred_check_branch
      %38 = sbr.rel (0) target = $region13
    $region12: #{tpu_custom_call.1} parent=1 // pred_region
      %s40 = ssub.s32 8704, 8704
      %41 = vsyncadd [#allocation6], %s40
      %s42 = sshll.u32 [#allocation7], 4
      %s43 = int_to_ptr.vmem [resolvable:$true] %s42
      %48 = dma.hbm_to_vmem [thread:$0]  %s2, 8704, %s43, [#allocation6], 512, 512, 32
    $region13: #{tpu_custom_call.1} parent=1 // pred_fallthru
      _
    // Predicated region
    $region14: #{tpu_custom_call.1} parent=1 // pred_check
      _
    $region15: #{tpu_custom_call.1} parent=1 // pred_check_branch
      %50 = sbr.rel (0) target = $region17
    $region16: #{tpu_custom_call.1} parent=1 // pred_region
      %s52 = ssub.s32 4480, 4480
      %53 = vsyncadd [#allocation9], %s52
      %s54 = sshll.u32 [#allocation8], 4
      %s55 = int_to_ptr.vmem [resolvable:$true] %s54
      %60 = dma.hbm_to_vmem [thread:$0]  %s3, 4480, %s55, [#allocation9], 128, 128, 8
    $region17: #{tpu_custom_call.1} parent=1 // pred_fallthru
      _
    // Predicated region
    $region18: #{tpu_custom_call.1} parent=1 // pred_check
      _
    $region19: #{tpu_custom_call.1} parent=1 // pred_check_branch
      %62 = sbr.rel (0) target = $region21
    $region20: #{tpu_custom_call.1} parent=1 // pred_region
      %63 = dma.done [#allocation3], 1024
    $region21: #{tpu_custom_call.1} parent=1 // pred_fallthru
      _
    // Predicated region
    $region22: #{tpu_custom_call.1} parent=1 // pred_check
      _
    $region23: #{tpu_custom_call.1} parent=1 // pred_check_branch
      %65 = sbr.rel (0) target = $region25
    $region24: #{tpu_custom_call.1} parent=1 // pred_region
      %66 = dma.done [#allocation6], 5120
    $region25: #{tpu_custom_call.1} parent=1 // pred_fallthru
      _
    // Predicated region
    $region26: #{tpu_custom_call.1} parent=1 // pred_check
      _
    $region27: #{tpu_custom_call.1} parent=1 // pred_check_branch
      %68 = sbr.rel (0) target = $region29
    $region28: #{tpu_custom_call.1} parent=1 // pred_region
      %69 = dma.done [#allocation6], 8704
    $region29: #{tpu_custom_call.1} parent=1 // pred_fallthru
      _
    // Predicated region
    $region30: #{tpu_custom_call.1} parent=1 // pred_check
      _
    $region31: #{tpu_custom_call.1} parent=1 // pred_check_branch
      %71 = sbr.rel (0) target = $region33
    $region32: #{tpu_custom_call.1} parent=1 // pred_region
      %72 = dma.done [#allocation9], 4480
    $region33: #{tpu_custom_call.1} parent=1 // pred_fallthru
      _
    %s74 = scalar_lea.vmem [#allocation7], 512
    %v75 = vld [vmem:[%s74] ss:$8 sm:$0xf]
    %v76 = vld [vmem:[#allocation2] sm:$0xff]
    %v77 = vld [vmem:[#allocation2 + $0x8] sm:$0xff]
    %v78 = vld [vmem:[#allocation2 + $0x10] sm:$0xff]
    %v79 = vld [vmem:[#allocation2 + $0x18] sm:$0xff]
    %v80 = vld [vmem:[#allocation2 + $0x20] sm:$0xff]
    %v81 = vld [vmem:[#allocation2 + $0x28] sm:$0xff]
    %v82 = vld [vmem:[#allocation2 + $0x30] sm:$0xff]
    %v83 = vld [vmem:[#allocation2 + $0x38] sm:$0xff]
    %v84 = vpack.c.bf16 %v77, %v76
    %v85 = vpack.c.bf16 %v79, %v78
    %v86 = vpack.c.bf16 %v81, %v80
    %v87 = vpack.c.bf16 %v83, %v82
    %v88 = vld [vmem:[#allocation5] sm:$0xff]
    %v89 = vld [vmem:[#allocation5 + $0x8] sm:$0xff]
    %v90 = vld [vmem:[#allocation5 + $0x10] sm:$0xff]
    %v91 = vld [vmem:[#allocation5 + $0x18] sm:$0xff]
    %v92 = vld [vmem:[#allocation5 + $0x20] sm:$0xff]
    %v93 = vld [vmem:[#allocation5 + $0x28] sm:$0xff]
    %v94 = vld [vmem:[#allocation5 + $0x30] sm:$0xff]
    %v95 = vld [vmem:[#allocation5 + $0x38] sm:$0xff]
    %v96 = vld [vmem:[#allocation5 + $0x40] sm:$0xff]
    %v97 = vld [vmem:[#allocation5 + $0x48] sm:$0xff]
    %v98 = vld [vmem:[#allocation5 + $0x50] sm:$0xff]
    %v99 = vld [vmem:[#allocation5 + $0x58] sm:$0xff]
    %v100 = vld [vmem:[#allocation5 + $0x60] sm:$0xff]
    %v101 = vld [vmem:[#allocation5 + $0x68] sm:$0xff]
    %v102 = vld [vmem:[#allocation5 + $0x70] sm:$0xff]
    %v103 = vld [vmem:[#allocation5 + $0x78] sm:$0xff]
    %v104 = vld [vmem:[#allocation5 + $0x80] sm:$0xff]
    %v105 = vld [vmem:[#allocation5 + $0x88] sm:$0xff]
    %v106 = vld [vmem:[#allocation5 + $0x90] sm:$0xff]
    %v107 = vld [vmem:[#allocation5 + $0x98] sm:$0xff]
    %v108 = vld [vmem:[#allocation5 + $0xa0] sm:$0xff]
    %v109 = vld [vmem:[#allocation5 + $0xa8] sm:$0xff]
    %v110 = vld [vmem:[#allocation5 + $0xb0] sm:$0xff]
    %v111 = vld [vmem:[#allocation5 + $0xb8] sm:$0xff]
    %v112 = vld [vmem:[#allocation5 + $0xc0] sm:$0xff]
    %v113 = vld [vmem:[#allocation5 + $0xc8] sm:$0xff]
    %v114 = vld [vmem:[#allocation5 + $0xd0] sm:$0xff]
    %v115 = vld [vmem:[#allocation5 + $0xd8] sm:$0xff]
    %v116 = vld [vmem:[#allocation5 + $0xe0] sm:$0xff]
    %v117 = vld [vmem:[#allocation5 + $0xe8] sm:$0xff]
    %v118 = vld [vmem:[#allocation5 + $0xf0] sm:$0xff]
    %v119 = vld [vmem:[#allocation5 + $0xf8] sm:$0xff]
    %v120 = vld [vmem:[#allocation5 + $0x100] sm:$0xff]
    %v121 = vld [vmem:[#allocation5 + $0x108] sm:$0xff]
    %v122 = vld [vmem:[#allocation5 + $0x110] sm:$0xff]
    %v123 = vld [vmem:[#allocation5 + $0x118] sm:$0xff]
    %v124 = vld [vmem:[#allocation5 + $0x120] sm:$0xff]
    %v125 = vld [vmem:[#allocation5 + $0x128] sm:$0xff]
    %v126 = vld [vmem:[#allocation5 + $0x130] sm:$0xff]
    %v127 = vld [vmem:[#allocation5 + $0x138] sm:$0xff]
    %v128 = vpack.c.bf16 %v92, %v88
    %v129 = vpack.c.bf16 %v93, %v89
    %v130 = vpack.c.bf16 %v94, %v90
    %v131 = vpack.c.bf16 %v95, %v91
    %v132 = vpack.c.bf16 %v100, %v96
    %v133 = vpack.c.bf16 %v101, %v97
    %v134 = vpack.c.bf16 %v102, %v98
    %v135 = vpack.c.bf16 %v103, %v99
    %v136 = vpack.c.bf16 %v108, %v104
    %v137 = vpack.c.bf16 %v109, %v105
    %v138 = vpack.c.bf16 %v110, %v106
    %v139 = vpack.c.bf16 %v111, %v107
    %v140 = vpack.c.bf16 %v116, %v112
    %v141 = vpack.c.bf16 %v117, %v113
    %v142 = vpack.c.bf16 %v118, %v114
    %v143 = vpack.c.bf16 %v119, %v115
    %v144 = vpack.c.bf16 %v124, %v120
    %v145 = vpack.c.bf16 %v125, %v121
    %v146 = vpack.c.bf16 %v126, %v122
    %v147 = vpack.c.bf16 %v127, %v123
    %v149 = vlaneseq
    %v150 = vshrl.u32 %v149, 7
    %v151 = vsub.s32 0, %v150
    %v152 = vrot.slane %v75, %v151
    %v153 = vlaneseq
    %v154 = vshrl.u32 %v153, 7
    %v155 = vsub.s32 1, %v154
    %v156 = vrot.slane %v75, %v155
    %v157 = vlaneseq
    %v158 = vshrl.u32 %v157, 7
    %v159 = vsub.s32 2, %v158
    %v160 = vrot.slane %v75, %v159
    %v161 = vlaneseq
    %v162 = vshrl.u32 %v161, 7
    %v163 = vsub.s32 3, %v162
    %v164 = vrot.slane %v75, %v163
    %vm169 = vcmask 654336
    %v171 = vsel %vm169, %v84, 0
    %v174 = vsel %vm169, %v85, 0
    %v177 = vsel %vm169, %v86, 0
    %v180 = vsel %vm169, %v87, 0
    %182 = vmatprep.subr.bf16.mxu0 %v129
    %183 = vmatpush1.bf16.msra.mxu0 %v128
    %184 = vmatprep.subr.bf16.mxu0 %v133
    %185 = vmatpush1.bf16.msra.mxu0 %v132
    %186 = vmatprep.subr.bf16.mxu0 %v137
    %187 = vmatpush1.bf16.msra.mxu0 %v136
    %188 = vmatprep.subr.bf16.mxu0 %v141
    %189 = vmatpush1.bf16.msra.mxu0 %v140
    %190 = vmatprep.subr.bf16.mxu0 %v145
    %191 = vmatpush1.bf16.msra.mxu0 %v144
    %192 = vmatprep.subr.bf16.mxu0 0
    %193 = vmatpush1.bf16.msra.mxu0 0
    %194 = vmatprep.subr.bf16.mxu0 0
    %195 = vmatpush1.bf16.msra.mxu0 0
    %196 = vmatprep.subr.bf16.mxu0 0
    %197 = vmatpush1.bf16.msra.mxu0 0
    %198 = vmatprep.subr.bf16.mxu0 0
    %199 = vmatpush1.bf16.msra.mxu0 0
    %200 = vmatprep.subr.bf16.mxu0 0
    %201 = vmatpush1.bf16.msra.mxu0 0
    %202 = vmatprep.subr.bf16.mxu0 0
    %203 = vmatpush1.bf16.msra.mxu0 0
    %204 = vmatprep.subr.bf16.mxu0 0
    %205 = vmatpush1.bf16.msra.mxu0 0
    %206 = vmatprep.subr.bf16.mxu0 0
    %207 = vmatpush1.bf16.msra.mxu0 0
    %208 = vmatprep.subr.bf16.mxu0 0
    %209 = vmatpush1.bf16.msra.mxu0 0
    %210 = vmatprep.subr.bf16.mxu0 0
    %211 = vmatpush1.bf16.msra.mxu0 0
    %212 = vmatprep.subr.bf16.mxu0 0
    %213 = vmatpush1.bf16.msra.mxu0 0
    %214 = vmatprep.mubr.bf16.mxu0 0
    %215 = vmatmul.mubr.bf16.gmra.mrb[0].mxu0 %v171
    %v216 = vpop.f32.mrb[0].mxu0
    %v217 = vadd.f32 %v152, %v216
    %v218 = vpop.f32.mrb[0].mxu0
    %v219 = vadd.f32 %v156, %v218
    %v220 = vpop.f32.mrb[0].mxu0
    %v221 = vadd.f32 %v152, %v220
    %v222 = vpop.f32.mrb[0].mxu0
    %v223 = vadd.f32 %v156, %v222
    %224 = vmatprep.mubr.bf16.mxu0 0
    %225 = vmatmul.mubr.bf16.gmra.mrb[0].mxu0 %v174
    %v226 = vpop.f32.mrb[0].mxu0
    %v227 = vadd.f32 %v152, %v226
    %v228 = vpop.f32.mrb[0].mxu0
    %v229 = vadd.f32 %v156, %v228
    %v230 = vpop.f32.mrb[0].mxu0
    %v231 = vadd.f32 %v152, %v230
    %v232 = vpop.f32.mrb[0].mxu0
    %v233 = vadd.f32 %v156, %v232
    %234 = vmatprep.mubr.bf16.mxu0 0
    %235 = vmatmul.mubr.bf16.gmra.mrb[0].mxu0 %v177
    %v236 = vpop.f32.mrb[0].mxu0
    %v237 = vadd.f32 %v152, %v236
    %v238 = vpop.f32.mrb[0].mxu0
    %v239 = vadd.f32 %v156, %v238
    %v240 = vpop.f32.mrb[0].mxu0
    %v241 = vadd.f32 %v152, %v240
    %v242 = vpop.f32.mrb[0].mxu0
    %v243 = vadd.f32 %v156, %v242
    %244 = vmatprep.mubr.bf16.mxu0 0
    %245 = vmatmul.mubr.bf16.gmra.mrb[0].mxu0 %v180
    %v246 = vpop.f32.mrb[0].mxu0
    %v247 = vadd.f32 %v152, %v246
    %v248 = vpop.f32.mrb[0].mxu0
    %v249 = vadd.f32 %v156, %v248
    %v250 = vpop.f32.mrb[0].mxu0
    %v251 = vadd.f32 %v152, %v250
    %v252 = vpop.f32.mrb[0].mxu0
    %v253 = vadd.f32 %v156, %v252
    %254 = vdwg.mxu0
    %255 = vmatprep.subr.bf16.mxu0 %v131
    %256 = vmatpush1.bf16.msra.mxu0 %v130
    %257 = vmatprep.subr.bf16.mxu0 %v135
    %258 = vmatpush1.bf16.msra.mxu0 %v134
    %259 = vmatprep.subr.bf16.mxu0 %v139
    %260 = vmatpush1.bf16.msra.mxu0 %v138
    %261 = vmatprep.subr.bf16.mxu0 %v143
    %262 = vmatpush1.bf16.msra.mxu0 %v142
    %263 = vmatprep.subr.bf16.mxu0 %v147
    %264 = vmatpush1.bf16.msra.mxu0 %v146
    %265 = vmatprep.subr.bf16.mxu0 0
    %266 = vmatpush1.bf16.msra.mxu0 0
    %267 = vmatprep.subr.bf16.mxu0 0
    %268 = vmatpush1.bf16.msra.mxu0 0
    %269 = vmatprep.subr.bf16.mxu0 0
    %270 = vmatpush1.bf16.msra.mxu0 0
    %271 = vmatprep.subr.bf16.mxu0 0
    %272 = vmatpush1.bf16.msra.mxu0 0
    %273 = vmatprep.subr.bf16.mxu0 0
    %274 = vmatpush1.bf16.msra.mxu0 0
    %275 = vmatprep.subr.bf16.mxu0 0
    %276 = vmatpush1.bf16.msra.mxu0 0
    %277 = vmatprep.subr.bf16.mxu0 0
    %278 = vmatpush1.bf16.msra.mxu0 0
    %279 = vmatprep.subr.bf16.mxu0 0
    %280 = vmatpush1.bf16.msra.mxu0 0
    %281 = vmatprep.subr.bf16.mxu0 0
    %282 = vmatpush1.bf16.msra.mxu0 0
    %283 = vmatprep.subr.bf16.mxu0 0
    %284 = vmatpush1.bf16.msra.mxu0 0
    %285 = vmatprep.subr.bf16.mxu0 0
    %286 = vmatpush1.bf16.msra.mxu0 0
    %287 = vmatprep.mubr.bf16.mxu0 0
    %288 = vmatmul.mubr.bf16.gmra.mrb[0].mxu0 %v171
    %v289 = vpop.f32.mrb[0].mxu0
    %v290 = vadd.f32 %v160, %v289
    %v291 = vpop.f32.mrb[0].mxu0
    %v292 = vadd.f32 %v164, %v291
    %v293 = vpop.f32.mrb[0].mxu0
    %v294 = vadd.f32 %v160, %v293
    %v295 = vpop.f32.mrb[0].mxu0
    %v296 = vadd.f32 %v164, %v295
    %297 = vmatprep.mubr.bf16.mxu0 0
    %298 = vmatmul.mubr.bf16.gmra.mrb[0].mxu0 %v174
    %v299 = vpop.f32.mrb[0].mxu0
    %v300 = vadd.f32 %v160, %v299
    %v301 = vpop.f32.mrb[0].mxu0
    %v302 = vadd.f32 %v164, %v301
    %v303 = vpop.f32.mrb[0].mxu0
    %v304 = vadd.f32 %v160, %v303
    %v305 = vpop.f32.mrb[0].mxu0
    %v306 = vadd.f32 %v164, %v305
    %307 = vmatprep.mubr.bf16.mxu0 0
    %308 = vmatmul.mubr.bf16.gmra.mrb[0].mxu0 %v177
    %v309 = vpop.f32.mrb[0].mxu0
    %v310 = vadd.f32 %v160, %v309
    %v311 = vpop.f32.mrb[0].mxu0
    %v312 = vadd.f32 %v164, %v311
    %v313 = vpop.f32.mrb[0].mxu0
    %v314 = vadd.f32 %v160, %v313
    %v315 = vpop.f32.mrb[0].mxu0
    %v316 = vadd.f32 %v164, %v315
    %317 = vmatprep.mubr.bf16.mxu0 0
    %318 = vmatmul.mubr.bf16.gmra.mrb[0].mxu0 %v180
    %v319 = vpop.f32.mrb[0].mxu0
    %v320 = vadd.f32 %v160, %v319
    %v321 = vpop.f32.mrb[0].mxu0
    %v322 = vadd.f32 %v164, %v321
    %v323 = vpop.f32.mrb[0].mxu0
    %v324 = vadd.f32 %v160, %v323
    %v325 = vpop.f32.mrb[0].mxu0
    %v326 = vadd.f32 %v164, %v325
    %327 = vdwg.mxu0
    %v328 = vld [vmem:[#allocation7] sm:$0xff]
    %v329 = vld [vmem:[#allocation7 + $0x8] sm:$0xff]
    %v330 = vld [vmem:[#allocation7 + $0x10] sm:$0xff]
    %v331 = vld [vmem:[#allocation7 + $0x18] sm:$0xff]
    %v332 = vld [vmem:[#allocation7 + $0x20] sm:$0xff]
    %v333 = vld [vmem:[#allocation7 + $0x28] sm:$0xff]
    %v334 = vld [vmem:[#allocation7 + $0x30] sm:$0xff]
    %v335 = vld [vmem:[#allocation7 + $0x38] sm:$0xff]
    %v336 = vld [vmem:[#allocation7 + $0x40] sm:$0xff]
    %v337 = vld [vmem:[#allocation7 + $0x48] sm:$0xff]
    %v338 = vld [vmem:[#allocation7 + $0x50] sm:$0xff]
    %v339 = vld [vmem:[#allocation7 + $0x58] sm:$0xff]
    %v340 = vld [vmem:[#allocation7 + $0x60] sm:$0xff]
    %v341 = vld [vmem:[#allocation7 + $0x68] sm:$0xff]
    %v342 = vld [vmem:[#allocation7 + $0x70] sm:$0xff]
    %v343 = vld [vmem:[#allocation7 + $0x78] sm:$0xff]
    %v344 = vld [vmem:[#allocation7 + $0x80] sm:$0xff]
    %v345 = vld [vmem:[#allocation7 + $0x88] sm:$0xff]
    %v346 = vld [vmem:[#allocation7 + $0x90] sm:$0xff]
    %v347 = vld [vmem:[#allocation7 + $0x98] sm:$0xff]
    %v348 = vld [vmem:[#allocation7 + $0xa0] sm:$0xff]
    %v349 = vld [vmem:[#allocation7 + $0xa8] sm:$0xff]
    %v350 = vld [vmem:[#allocation7 + $0xb0] sm:$0xff]
    %v351 = vld [vmem:[#allocation7 + $0xb8] sm:$0xff]
    %v352 = vld [vmem:[#allocation7 + $0xc0] sm:$0xff]
    %v353 = vld [vmem:[#allocation7 + $0xc8] sm:$0xff]
    %v354 = vld [vmem:[#allocation7 + $0xd0] sm:$0xff]
    %v355 = vld [vmem:[#allocation7 + $0xd8] sm:$0xff]
    %v356 = vld [vmem:[#allocation7 + $0xe0] sm:$0xff]
    %v357 = vld [vmem:[#allocation7 + $0xe8] sm:$0xff]
    %v358 = vld [vmem:[#allocation7 + $0xf0] sm:$0xff]
    %v359 = vld [vmem:[#allocation7 + $0xf8] sm:$0xff]
    %v360 = vld [vmem:[#allocation7 + $0x100] sm:$0xff]
    %v361 = vld [vmem:[#allocation7 + $0x108] sm:$0xff]
    %v362 = vld [vmem:[#allocation7 + $0x110] sm:$0xff]
    %v363 = vld [vmem:[#allocation7 + $0x118] sm:$0xff]
    %v364 = vld [vmem:[#allocation7 + $0x120] sm:$0xff]
    %v365 = vld [vmem:[#allocation7 + $0x128] sm:$0xff]
    %v366 = vld [vmem:[#allocation7 + $0x130] sm:$0xff]
    %v367 = vld [vmem:[#allocation7 + $0x138] sm:$0xff]
    %v368 = vld [vmem:[#allocation7 + $0x140] sm:$0xff]
    %v369 = vld [vmem:[#allocation7 + $0x148] sm:$0xff]
    %v370 = vld [vmem:[#allocation7 + $0x150] sm:$0xff]
    %v371 = vld [vmem:[#allocation7 + $0x158] sm:$0xff]
    %v372 = vld [vmem:[#allocation7 + $0x160] sm:$0xff]
    %v373 = vld [vmem:[#allocation7 + $0x168] sm:$0xff]
    %v374 = vld [vmem:[#allocation7 + $0x170] sm:$0xff]
    %v375 = vld [vmem:[#allocation7 + $0x178] sm:$0xff]
    %v376 = vld [vmem:[#allocation7 + $0x180] sm:$0xff]
    %v377 = vld [vmem:[#allocation7 + $0x188] sm:$0xff]
    %v378 = vld [vmem:[#allocation7 + $0x190] sm:$0xff]
    %v379 = vld [vmem:[#allocation7 + $0x198] sm:$0xff]
    %v380 = vld [vmem:[#allocation7 + $0x1a0] sm:$0xff]
    %v381 = vld [vmem:[#allocation7 + $0x1a8] sm:$0xff]
    %v382 = vld [vmem:[#allocation7 + $0x1b0] sm:$0xff]
    %v383 = vld [vmem:[#allocation7 + $0x1b8] sm:$0xff]
    %v384 = vld [vmem:[#allocation7 + $0x1c0] sm:$0xff]
    %v385 = vld [vmem:[#allocation7 + $0x1c8] sm:$0xff]
    %v386 = vld [vmem:[#allocation7 + $0x1d0] sm:$0xff]
    %v387 = vld [vmem:[#allocation7 + $0x1d8] sm:$0xff]
    %v388 = vld [vmem:[#allocation7 + $0x1e0] sm:$0xff]
    %v389 = vld [vmem:[#allocation7 + $0x1e8] sm:$0xff]
    %v390 = vld [vmem:[#allocation7 + $0x1f0] sm:$0xff]
    %v391 = vld [vmem:[#allocation7 + $0x1f8] sm:$0xff]
    %v392 = vpack.c.bf16 %v332, %v328
    %v393 = vpack.c.bf16 %v333, %v329
    %v394 = vpack.c.bf16 %v334, %v330
    %v395 = vpack.c.bf16 %v335, %v331
    %v396 = vpack.c.bf16 %v340, %v336
    %v397 = vpack.c.bf16 %v341, %v337
    %v398 = vpack.c.bf16 %v342, %v338
    %v399 = vpack.c.bf16 %v343, %v339
    %v400 = vpack.c.bf16 %v348, %v344
    %v401 = vpack.c.bf16 %v349, %v345
    %v402 = vpack.c.bf16 %v350, %v346
    %v403 = vpack.c.bf16 %v351, %v347
    %v404 = vpack.c.bf16 %v356, %v352
    %v405 = vpack.c.bf16 %v357, %v353
    %v406 = vpack.c.bf16 %v358, %v354
    %v407 = vpack.c.bf16 %v359, %v355
    %v408 = vpack.c.bf16 %v364, %v360
    %v409 = vpack.c.bf16 %v365, %v361
    %v410 = vpack.c.bf16 %v366, %v362
    %v411 = vpack.c.bf16 %v367, %v363
    %v412 = vpack.c.bf16 %v372, %v368
    %v413 = vpack.c.bf16 %v373, %v369
    %v414 = vpack.c.bf16 %v374, %v370
    %v415 = vpack.c.bf16 %v375, %v371
    %v416 = vpack.c.bf16 %v380, %v376
    %v417 = vpack.c.bf16 %v381, %v377
    %v418 = vpack.c.bf16 %v382, %v378
    %v419 = vpack.c.bf16 %v383, %v379
    %v420 = vpack.c.bf16 %v388, %v384
    %v421 = vpack.c.bf16 %v389, %v385
    %v422 = vpack.c.bf16 %v390, %v386
    %v423 = vpack.c.bf16 %v391, %v387
    %v424 = vld [vmem:[#allocation8] sm:$0xff]
    %v425 = vld [vmem:[#allocation8 + $0x8] sm:$0xff]
    %v426 = vpack.c.bf16 %v424, %v424
    %427 = vmatprep.subr.bf16.mxu0 %v393
    %428 = vmatpush1.bf16.msra.mxu0 %v392
    %429 = vmatprep.subr.bf16.mxu0 %v397
    %430 = vmatpush1.bf16.msra.mxu0 %v396
    %431 = vmatprep.subr.bf16.mxu0 %v401
    %432 = vmatpush1.bf16.msra.mxu0 %v400
    %433 = vmatprep.subr.bf16.mxu0 %v405
    %434 = vmatpush1.bf16.msra.mxu0 %v404
    %435 = vmatprep.subr.bf16.mxu0 %v409
    %436 = vmatpush1.bf16.msra.mxu0 %v408
    %437 = vmatprep.subr.bf16.mxu0 %v413
    %438 = vmatpush1.bf16.msra.mxu0 %v412
    %439 = vmatprep.subr.bf16.mxu0 %v417
    %440 = vmatpush1.bf16.msra.mxu0 %v416
    %441 = vmatprep.subr.bf16.mxu0 %v421
    %442 = vmatpush1.bf16.msra.mxu0 %v420
    %443 = vmatprep.subr.bf16.mxu0 0
    %444 = vmatpush1.bf16.msra.mxu0 0
    %445 = vmatprep.subr.bf16.mxu0 0
    %446 = vmatpush1.bf16.msra.mxu0 0
    %447 = vmatprep.subr.bf16.mxu0 0
    %448 = vmatpush1.bf16.msra.mxu0 0
    %449 = vmatprep.subr.bf16.mxu0 0
    %450 = vmatpush1.bf16.msra.mxu0 0
    %451 = vmatprep.subr.bf16.mxu0 0
    %452 = vmatpush1.bf16.msra.mxu0 0
    %453 = vmatprep.subr.bf16.mxu0 0
    %454 = vmatpush1.bf16.msra.mxu0 0
    %455 = vmatprep.subr.bf16.mxu0 0
    %456 = vmatpush1.bf16.msra.mxu0 0
    %457 = vmatprep.subr.bf16.mxu0 0
    %458 = vmatpush1.bf16.msra.mxu0 0
    %459 = vmatprep.mubr.bf16.mxu0 0
    %460 = vmatmul.mubr.bf16.gmra.mrb[0].mxu0 %v426
    %v461 = vpop.f32.mrb[0].mxu0
    %v462 = vadd.f32 0.0, %v461
    %v463 = vpop.f32.mrb[0].mxu0
    %v464 = vadd.f32 0.0, %v463
    %v465 = vpop.f32.mrb[0].mxu0
    %v466 = vpop.f32.mrb[0].mxu0
    %467 = vdwg.mxu0
    %468 = vmatprep.subr.bf16.mxu0 %v395
    %469 = vmatpush1.bf16.msra.mxu0 %v394
    %470 = vmatprep.subr.bf16.mxu0 %v399
    %471 = vmatpush1.bf16.msra.mxu0 %v398
    %472 = vmatprep.subr.bf16.mxu0 %v403
    %473 = vmatpush1.bf16.msra.mxu0 %v402
    %474 = vmatprep.subr.bf16.mxu0 %v407
    %475 = vmatpush1.bf16.msra.mxu0 %v406
    %476 = vmatprep.subr.bf16.mxu0 %v411
    %477 = vmatpush1.bf16.msra.mxu0 %v410
    %478 = vmatprep.subr.bf16.mxu0 %v415
    %479 = vmatpush1.bf16.msra.mxu0 %v414
    %480 = vmatprep.subr.bf16.mxu0 %v419
    %481 = vmatpush1.bf16.msra.mxu0 %v418
    %482 = vmatprep.subr.bf16.mxu0 %v423
    %483 = vmatpush1.bf16.msra.mxu0 %v422
    %484 = vmatprep.subr.bf16.mxu0 0
    %485 = vmatpush1.bf16.msra.mxu0 0
    %486 = vmatprep.subr.bf16.mxu0 0
    %487 = vmatpush1.bf16.msra.mxu0 0
    %488 = vmatprep.subr.bf16.mxu0 0
    %489 = vmatpush1.bf16.msra.mxu0 0
    %490 = vmatprep.subr.bf16.mxu0 0
    %491 = vmatpush1.bf16.msra.mxu0 0
    %492 = vmatprep.subr.bf16.mxu0 0
    %493 = vmatpush1.bf16.msra.mxu0 0
    %494 = vmatprep.subr.bf16.mxu0 0
    %495 = vmatpush1.bf16.msra.mxu0 0
    %496 = vmatprep.subr.bf16.mxu0 0
    %497 = vmatpush1.bf16.msra.mxu0 0
    %498 = vmatprep.subr.bf16.mxu0 0
    %499 = vmatpush1.bf16.msra.mxu0 0
    %500 = vmatprep.mubr.bf16.mxu0 0
    %501 = vmatmul.mubr.bf16.gmra.mrb[0].mxu0 %v426
    %v502 = vpop.f32.mrb[0].mxu0
    %v503 = vadd.f32 0.0, %v502
    %v504 = vpop.f32.mrb[0].mxu0
    %v505 = vadd.f32 0.0, %v504
    %v506 = vpop.f32.mrb[0].mxu0
    %v507 = vpop.f32.mrb[0].mxu0
    %508 = vdwg.mxu0
    %v509 = vadd.f32 %v217, %v462
    %v510 = vadd.f32 %v219, %v464
    %v511 = vadd.f32 %v290, %v503
    %v512 = vadd.f32 %v292, %v505
    %v513 = vxor.u32 %v509, 2147483648
    %v514 = vxor.u32 %v510, 2147483648
    %v515 = vxor.u32 %v511, 2147483648
    %v516 = vxor.u32 %v512, 2147483648
    %v517 = vmul.f32 %v513, 1.442695
    %v518 = vpow.pop %v517
    %v519 = vmul.f32 %v514, 1.442695
    %v520 = vpow.pop %v519
    %v521 = vmul.f32 %v515, 1.442695
    %v522 = vpow.pop %v521
    %v523 = vmul.f32 %v516, 1.442695
    %v524 = vpow.pop %v523
    %v525 = vadd.f32 %v518, 1.0
    %v526 = vadd.f32 %v520, 1.0
    %v527 = vadd.f32 %v522, 1.0
    %v528 = vadd.f32 %v524, 1.0
    %v529 = vrcp.pop %v525
    %v530 = vmul.f32 1.0, %v529
    %v531 = vrcp.pop %v526
    %v532 = vmul.f32 1.0, %v531
    %v533 = vrcp.pop %v527
    %v534 = vmul.f32 1.0, %v533
    %v535 = vrcp.pop %v528
    %v536 = vmul.f32 1.0, %v535
    %v537 = vmul.f32 %v536, 2.0
    %v538 = vsub.f32 %v537, 1.0
    %v539 = vmul.f32 %v532, %v425
    %v540 = vmul.f32 %v530, %v538
    %v541 = vadd.f32 %v539, %v540
    %v542 = vtanh.pop %v541
    %v543 = vmul.f32 %v534, %v542
    %v544 = vpack.c.bf16 %v543, %v543
    %545 = vmatprep.subr.bf16.mxu0 %v393
    %546 = vmatpush1.bf16.msra.mxu0 %v392
    %547 = vmatprep.subr.bf16.mxu0 %v397
    %548 = vmatpush1.bf16.msra.mxu0 %v396
    %549 = vmatprep.subr.bf16.mxu0 %v401
    %550 = vmatpush1.bf16.msra.mxu0 %v400
    %551 = vmatprep.subr.bf16.mxu0 %v405
    %552 = vmatpush1.bf16.msra.mxu0 %v404
    %553 = vmatprep.subr.bf16.mxu0 %v409
    %554 = vmatpush1.bf16.msra.mxu0 %v408
    %555 = vmatprep.subr.bf16.mxu0 %v413
    %556 = vmatpush1.bf16.msra.mxu0 %v412
    %557 = vmatprep.subr.bf16.mxu0 %v417
    %558 = vmatpush1.bf16.msra.mxu0 %v416
    %559 = vmatprep.subr.bf16.mxu0 %v421
    %560 = vmatpush1.bf16.msra.mxu0 %v420
    %561 = vmatprep.subr.bf16.mxu0 0
    %562 = vmatpush1.bf16.msra.mxu0 0
    %563 = vmatprep.subr.bf16.mxu0 0
    %564 = vmatpush1.bf16.msra.mxu0 0
    %565 = vmatprep.subr.bf16.mxu0 0
    %566 = vmatpush1.bf16.msra.mxu0 0
    %567 = vmatprep.subr.bf16.mxu0 0
    %568 = vmatpush1.bf16.msra.mxu0 0
    %569 = vmatprep.subr.bf16.mxu0 0
    %570 = vmatpush1.bf16.msra.mxu0 0
    %571 = vmatprep.subr.bf16.mxu0 0
    %572 = vmatpush1.bf16.msra.mxu0 0
    %573 = vmatprep.subr.bf16.mxu0 0
    %574 = vmatpush1.bf16.msra.mxu0 0
    %575 = vmatprep.subr.bf16.mxu0 0
    %576 = vmatpush1.bf16.msra.mxu0 0
    %577 = vmatprep.mubr.bf16.mxu0 0
    %578 = vmatmul.mubr.bf16.gmra.mrb[0].mxu0 %v544
    %v579 = vpop.f32.mrb[0].mxu0
    %v580 = vadd.f32 0.0, %v579
    %v581 = vpop.f32.mrb[0].mxu0
    %v582 = vadd.f32 0.0, %v581
    %v583 = vpop.f32.mrb[0].mxu0
    %v584 = vpop.f32.mrb[0].mxu0
    %585 = vdwg.mxu0
    %586 = vmatprep.subr.bf16.mxu0 %v395
    %587 = vmatpush1.bf16.msra.mxu0 %v394
    %588 = vmatprep.subr.bf16.mxu0 %v399
    %589 = vmatpush1.bf16.msra.mxu0 %v398
    %590 = vmatprep.subr.bf16.mxu0 %v403
    %591 = vmatpush1.bf16.msra.mxu0 %v402
    %592 = vmatprep.subr.bf16.mxu0 %v407
    %593 = vmatpush1.bf16.msra.mxu0 %v406
    %594 = vmatprep.subr.bf16.mxu0 %v411
    %595 = vmatpush1.bf16.msra.mxu0 %v410
    %596 = vmatprep.subr.bf16.mxu0 %v415
    %597 = vmatpush1.bf16.msra.mxu0 %v414
    %598 = vmatprep.subr.bf16.mxu0 %v419
    %599 = vmatpush1.bf16.msra.mxu0 %v418
    %600 = vmatprep.subr.bf16.mxu0 %v423
    %601 = vmatpush1.bf16.msra.mxu0 %v422
    %602 = vmatprep.subr.bf16.mxu0 0
    %603 = vmatpush1.bf16.msra.mxu0 0
    %604 = vmatprep.subr.bf16.mxu0 0
    %605 = vmatpush1.bf16.msra.mxu0 0
    %606 = vmatprep.subr.bf16.mxu0 0
    %607 = vmatpush1.bf16.msra.mxu0 0
    %608 = vmatprep.subr.bf16.mxu0 0
    %609 = vmatpush1.bf16.msra.mxu0 0
    %610 = vmatprep.subr.bf16.mxu0 0
    %611 = vmatpush1.bf16.msra.mxu0 0
    %612 = vmatprep.subr.bf16.mxu0 0
    %613 = vmatpush1.bf16.msra.mxu0 0
    %614 = vmatprep.subr.bf16.mxu0 0
    %615 = vmatpush1.bf16.msra.mxu0 0
    %616 = vmatprep.subr.bf16.mxu0 0
    %617 = vmatpush1.bf16.msra.mxu0 0
    %618 = vmatprep.mubr.bf16.mxu0 0
    %619 = vmatmul.mubr.bf16.gmra.mrb[0].mxu0 %v544
    %v620 = vpop.f32.mrb[0].mxu0
    %v621 = vadd.f32 0.0, %v620
    %v622 = vpop.f32.mrb[0].mxu0
    %v623 = vadd.f32 0.0, %v622
    %v624 = vpop.f32.mrb[0].mxu0
    %v625 = vpop.f32.mrb[0].mxu0
    %626 = vdwg.mxu0
    %v627 = vadd.f32 %v221, %v580
    %v628 = vadd.f32 %v223, %v582
    %v629 = vadd.f32 %v294, %v621
    %v630 = vadd.f32 %v296, %v623
    %v631 = vxor.u32 %v627, 2147483648
    %v632 = vxor.u32 %v628, 2147483648
    %v633 = vxor.u32 %v629, 2147483648
    %v634 = vxor.u32 %v630, 2147483648
    %v635 = vmul.f32 %v631, 1.442695
    %v636 = vpow.pop %v635
    %v637 = vmul.f32 %v632, 1.442695
    %v638 = vpow.pop %v637
    %v639 = vmul.f32 %v633, 1.442695
    %v640 = vpow.pop %v639
    %v641 = vmul.f32 %v634, 1.442695
    %v642 = vpow.pop %v641
    %v643 = vadd.f32 %v636, 1.0
    %v644 = vadd.f32 %v638, 1.0
    %v645 = vadd.f32 %v640, 1.0
    %v646 = vadd.f32 %v642, 1.0
    %v647 = vrcp.pop %v643
    %v648 = vmul.f32 1.0, %v647
    %v649 = vrcp.pop %v644
    %v650 = vmul.f32 1.0, %v649
    %v651 = vrcp.pop %v645
    %v652 = vmul.f32 1.0, %v651
    %v653 = vrcp.pop %v646
    %v654 = vmul.f32 1.0, %v653
    %v655 = vmul.f32 %v654, 2.0
    %v656 = vsub.f32 %v655, 1.0
    %v657 = vmul.f32 %v650, %v541
    %v658 = vmul.f32 %v648, %v656
    %v659 = vadd.f32 %v657, %v658
    %v660 = vtanh.pop %v659
    %v661 = vmul.f32 %v652, %v660
    %v662 = vpack.c.bf16 %v661, %v661
    %663 = vmatprep.subr.bf16.mxu0 %v393
    %664 = vmatpush1.bf16.msra.mxu0 %v392
    %665 = vmatprep.subr.bf16.mxu0 %v397
    %666 = vmatpush1.bf16.msra.mxu0 %v396
    %667 = vmatprep.subr.bf16.mxu0 %v401
    %668 = vmatpush1.bf16.msra.mxu0 %v400
    %669 = vmatprep.subr.bf16.mxu0 %v405
    %670 = vmatpush1.bf16.msra.mxu0 %v404
    %671 = vmatprep.subr.bf16.mxu0 %v409
    %672 = vmatpush1.bf16.msra.mxu0 %v408
    %673 = vmatprep.subr.bf16.mxu0 %v413
    %674 = vmatpush1.bf16.msra.mxu0 %v412
    %675 = vmatprep.subr.bf16.mxu0 %v417
    %676 = vmatpush1.bf16.msra.mxu0 %v416
    %677 = vmatprep.subr.bf16.mxu0 %v421
    %678 = vmatpush1.bf16.msra.mxu0 %v420
    %679 = vmatprep.subr.bf16.mxu0 0
    %680 = vmatpush1.bf16.msra.mxu0 0
    %681 = vmatprep.subr.bf16.mxu0 0
    %682 = vmatpush1.bf16.msra.mxu0 0
    %683 = vmatprep.subr.bf16.mxu0 0
    %684 = vmatpush1.bf16.msra.mxu0 0
    %685 = vmatprep.subr.bf16.mxu0 0
    %686 = vmatpush1.bf16.msra.mxu0 0
    %687 = vmatprep.subr.bf16.mxu0 0
    %688 = vmatpush1.bf16.msra.mxu0 0
    %689 = vmatprep.subr.bf16.mxu0 0
    %690 = vmatpush1.bf16.msra.mxu0 0
    %691 = vmatprep.subr.bf16.mxu0 0
    %692 = vmatpush1.bf16.msra.mxu0 0
    %693 = vmatprep.subr.bf16.mxu0 0
    %694 = vmatpush1.bf16.msra.mxu0 0
    %695 = vmatprep.mubr.bf16.mxu0 0
    %696 = vmatmul.mubr.bf16.gmra.mrb[0].mxu0 %v662
    %v697 = vpop.f32.mrb[0].mxu0
    %v698 = vadd.f32 0.0, %v697
    %v699 = vpop.f32.mrb[0].mxu0
    %v700 = vadd.f32 0.0, %v699
    %v701 = vpop.f32.mrb[0].mxu0
    %v702 = vpop.f32.mrb[0].mxu0
    %703 = vdwg.mxu0
    %704 = vmatprep.subr.bf16.mxu0 %v395
    %705 = vmatpush1.bf16.msra.mxu0 %v394
    %706 = vmatprep.subr.bf16.mxu0 %v399
    %707 = vmatpush1.bf16.msra.mxu0 %v398
    %708 = vmatprep.subr.bf16.mxu0 %v403
    %709 = vmatpush1.bf16.msra.mxu0 %v402
    %710 = vmatprep.subr.bf16.mxu0 %v407
    %711 = vmatpush1.bf16.msra.mxu0 %v406
    %712 = vmatprep.subr.bf16.mxu0 %v411
    %713 = vmatpush1.bf16.msra.mxu0 %v410
    %714 = vmatprep.subr.bf16.mxu0 %v415
    %715 = vmatpush1.bf16.msra.mxu0 %v414
    %716 = vmatprep.subr.bf16.mxu0 %v419
    %717 = vmatpush1.bf16.msra.mxu0 %v418
    %718 = vmatprep.subr.bf16.mxu0 %v423
    %719 = vmatpush1.bf16.msra.mxu0 %v422
    %720 = vmatprep.subr.bf16.mxu0 0
    %721 = vmatpush1.bf16.msra.mxu0 0
    %722 = vmatprep.subr.bf16.mxu0 0
    %723 = vmatpush1.bf16.msra.mxu0 0
    %724 = vmatprep.subr.bf16.mxu0 0
    %725 = vmatpush1.bf16.msra.mxu0 0
    %726 = vmatprep.subr.bf16.mxu0 0
    %727 = vmatpush1.bf16.msra.mxu0 0
    %728 = vmatprep.subr.bf16.mxu0 0
    %729 = vmatpush1.bf16.msra.mxu0 0
    %730 = vmatprep.subr.bf16.mxu0 0
    %731 = vmatpush1.bf16.msra.mxu0 0
    %732 = vmatprep.subr.bf16.mxu0 0
    %733 = vmatpush1.bf16.msra.mxu0 0
    %734 = vmatprep.subr.bf16.mxu0 0
    %735 = vmatpush1.bf16.msra.mxu0 0
    %736 = vmatprep.mubr.bf16.mxu0 0
    %737 = vmatmul.mubr.bf16.gmra.mrb[0].mxu0 %v662
    %v738 = vpop.f32.mrb[0].mxu0
    %v739 = vadd.f32 0.0, %v738
    %v740 = vpop.f32.mrb[0].mxu0
    %v741 = vadd.f32 0.0, %v740
    %v742 = vpop.f32.mrb[0].mxu0
    %v743 = vpop.f32.mrb[0].mxu0
    %744 = vdwg.mxu0
    %v745 = vadd.f32 %v227, %v698
    %v746 = vadd.f32 %v229, %v700
    %v747 = vadd.f32 %v300, %v739
    %v748 = vadd.f32 %v302, %v741
    %v749 = vxor.u32 %v745, 2147483648
    %v750 = vxor.u32 %v746, 2147483648
    %v751 = vxor.u32 %v747, 2147483648
    %v752 = vxor.u32 %v748, 2147483648
    %v753 = vmul.f32 %v749, 1.442695
    %v754 = vpow.pop %v753
    %v755 = vmul.f32 %v750, 1.442695
    %v756 = vpow.pop %v755
    %v757 = vmul.f32 %v751, 1.442695
    %v758 = vpow.pop %v757
    %v759 = vmul.f32 %v752, 1.442695
    %v760 = vpow.pop %v759
    %v761 = vadd.f32 %v754, 1.0
    %v762 = vadd.f32 %v756, 1.0
    %v763 = vadd.f32 %v758, 1.0
    %v764 = vadd.f32 %v760, 1.0
    %v765 = vrcp.pop %v761
    %v766 = vmul.f32 1.0, %v765
    %v767 = vrcp.pop %v762
    %v768 = vmul.f32 1.0, %v767
    %v769 = vrcp.pop %v763
    %v770 = vmul.f32 1.0, %v769
    %v771 = vrcp.pop %v764
    %v772 = vmul.f32 1.0, %v771
    %v773 = vmul.f32 %v772, 2.0
    %v774 = vsub.f32 %v773, 1.0
    %v775 = vmul.f32 %v768, %v659
    %v776 = vmul.f32 %v766, %v774
    %v777 = vadd.f32 %v775, %v776
    %v778 = vtanh.pop %v777
    %v779 = vmul.f32 %v770, %v778
    %v780 = vpack.c.bf16 %v779, %v779
    %781 = vmatprep.subr.bf16.mxu0 %v393
    %782 = vmatpush1.bf16.msra.mxu0 %v392
    %783 = vmatprep.subr.bf16.mxu0 %v397
    %784 = vmatpush1.bf16.msra.mxu0 %v396
    %785 = vmatprep.subr.bf16.mxu0 %v401
    %786 = vmatpush1.bf16.msra.mxu0 %v400
    %787 = vmatprep.subr.bf16.mxu0 %v405
    %788 = vmatpush1.bf16.msra.mxu0 %v404
    %789 = vmatprep.subr.bf16.mxu0 %v409
    %790 = vmatpush1.bf16.msra.mxu0 %v408
    %791 = vmatprep.subr.bf16.mxu0 %v413
    %792 = vmatpush1.bf16.msra.mxu0 %v412
    %793 = vmatprep.subr.bf16.mxu0 %v417
    %794 = vmatpush1.bf16.msra.mxu0 %v416
    %795 = vmatprep.subr.bf16.mxu0 %v421
    %796 = vmatpush1.bf16.msra.mxu0 %v420
    %797 = vmatprep.subr.bf16.mxu0 0
    %798 = vmatpush1.bf16.msra.mxu0 0
    %799 = vmatprep.subr.bf16.mxu0 0
    %800 = vmatpush1.bf16.msra.mxu0 0
    %801 = vmatprep.subr.bf16.mxu0 0
    %802 = vmatpush1.bf16.msra.mxu0 0
    %803 = vmatprep.subr.bf16.mxu0 0
    %804 = vmatpush1.bf16.msra.mxu0 0
    %805 = vmatprep.subr.bf16.mxu0 0
    %806 = vmatpush1.bf16.msra.mxu0 0
    %807 = vmatprep.subr.bf16.mxu0 0
    %808 = vmatpush1.bf16.msra.mxu0 0
    %809 = vmatprep.subr.bf16.mxu0 0
    %810 = vmatpush1.bf16.msra.mxu0 0
    %811 = vmatprep.subr.bf16.mxu0 0
    %812 = vmatpush1.bf16.msra.mxu0 0
    %813 = vmatprep.mubr.bf16.mxu0 0
    %814 = vmatmul.mubr.bf16.gmra.mrb[0].mxu0 %v780
    %v815 = vpop.f32.mrb[0].mxu0
    %v816 = vadd.f32 0.0, %v815
    %v817 = vpop.f32.mrb[0].mxu0
    %v818 = vadd.f32 0.0, %v817
    %v819 = vpop.f32.mrb[0].mxu0
    %v820 = vpop.f32.mrb[0].mxu0
    %821 = vdwg.mxu0
    %822 = vmatprep.subr.bf16.mxu0 %v395
    %823 = vmatpush1.bf16.msra.mxu0 %v394
    %824 = vmatprep.subr.bf16.mxu0 %v399
    %825 = vmatpush1.bf16.msra.mxu0 %v398
    %826 = vmatprep.subr.bf16.mxu0 %v403
    %827 = vmatpush1.bf16.msra.mxu0 %v402
    %828 = vmatprep.subr.bf16.mxu0 %v407
    %829 = vmatpush1.bf16.msra.mxu0 %v406
    %830 = vmatprep.subr.bf16.mxu0 %v411
    %831 = vmatpush1.bf16.msra.mxu0 %v410
    %832 = vmatprep.subr.bf16.mxu0 %v415
    %833 = vmatpush1.bf16.msra.mxu0 %v414
    %834 = vmatprep.subr.bf16.mxu0 %v419
    %835 = vmatpush1.bf16.msra.mxu0 %v418
    %836 = vmatprep.subr.bf16.mxu0 %v423
    %837 = vmatpush1.bf16.msra.mxu0 %v422
    %838 = vmatprep.subr.bf16.mxu0 0
    %839 = vmatpush1.bf16.msra.mxu0 0
    %840 = vmatprep.subr.bf16.mxu0 0
    %841 = vmatpush1.bf16.msra.mxu0 0
    %842 = vmatprep.subr.bf16.mxu0 0
    %843 = vmatpush1.bf16.msra.mxu0 0
    %844 = vmatprep.subr.bf16.mxu0 0
    %845 = vmatpush1.bf16.msra.mxu0 0
    %846 = vmatprep.subr.bf16.mxu0 0
    %847 = vmatpush1.bf16.msra.mxu0 0
    %848 = vmatprep.subr.bf16.mxu0 0
    %849 = vmatpush1.bf16.msra.mxu0 0
    %850 = vmatprep.subr.bf16.mxu0 0
    %851 = vmatpush1.bf16.msra.mxu0 0
    %852 = vmatprep.subr.bf16.mxu0 0
    %853 = vmatpush1.bf16.msra.mxu0 0
    %854 = vmatprep.mubr.bf16.mxu0 0
    %855 = vmatmul.mubr.bf16.gmra.mrb[0].mxu0 %v780
    %v856 = vpop.f32.mrb[0].mxu0
    %v857 = vadd.f32 0.0, %v856
    %v858 = vpop.f32.mrb[0].mxu0
    %v859 = vadd.f32 0.0, %v858
    %v860 = vpop.f32.mrb[0].mxu0
    %v861 = vpop.f32.mrb[0].mxu0
    %862 = vdwg.mxu0
    %v863 = vadd.f32 %v231, %v816
    %v864 = vadd.f32 %v233, %v818
    %v865 = vadd.f32 %v304, %v857
    %v866 = vadd.f32 %v306, %v859
    %v867 = vxor.u32 %v863, 2147483648
    %v868 = vxor.u32 %v864, 2147483648
    %v869 = vxor.u32 %v865, 2147483648
    %v870 = vxor.u32 %v866, 2147483648
    %v871 = vmul.f32 %v867, 1.442695
    %v872 = vpow.pop %v871
    %v873 = vmul.f32 %v868, 1.442695
    %v874 = vpow.pop %v873
    %v875 = vmul.f32 %v869, 1.442695
    %v876 = vpow.pop %v875
    %v877 = vmul.f32 %v870, 1.442695
    %v878 = vpow.pop %v877
    %v879 = vadd.f32 %v872, 1.0
    %v880 = vadd.f32 %v874, 1.0
    %v881 = vadd.f32 %v876, 1.0
    %v882 = vadd.f32 %v878, 1.0
    %v883 = vrcp.pop %v879
    %v884 = vmul.f32 1.0, %v883
    %v885 = vrcp.pop %v880
    %v886 = vmul.f32 1.0, %v885
    %v887 = vrcp.pop %v881
    %v888 = vmul.f32 1.0, %v887
    %v889 = vrcp.pop %v882
    %v890 = vmul.f32 1.0, %v889
    %v891 = vmul.f32 %v890, 2.0
    %v892 = vsub.f32 %v891, 1.0
    %v893 = vmul.f32 %v886, %v777
    %v894 = vmul.f32 %v884, %v892
    %v895 = vadd.f32 %v893, %v894
    %v896 = vtanh.pop %v895
    %v897 = vmul.f32 %v888, %v896
    %v898 = vpack.c.bf16 %v897, %v897
    %899 = vmatprep.subr.bf16.mxu0 %v393
    %900 = vmatpush1.bf16.msra.mxu0 %v392
    %901 = vmatprep.subr.bf16.mxu0 %v397
    %902 = vmatpush1.bf16.msra.mxu0 %v396
    %903 = vmatprep.subr.bf16.mxu0 %v401
    %904 = vmatpush1.bf16.msra.mxu0 %v400
    %905 = vmatprep.subr.bf16.mxu0 %v405
    %906 = vmatpush1.bf16.msra.mxu0 %v404
    %907 = vmatprep.subr.bf16.mxu0 %v409
    %908 = vmatpush1.bf16.msra.mxu0 %v408
    %909 = vmatprep.subr.bf16.mxu0 %v413
    %910 = vmatpush1.bf16.msra.mxu0 %v412
    %911 = vmatprep.subr.bf16.mxu0 %v417
    %912 = vmatpush1.bf16.msra.mxu0 %v416
    %913 = vmatprep.subr.bf16.mxu0 %v421
    %914 = vmatpush1.bf16.msra.mxu0 %v420
    %915 = vmatprep.subr.bf16.mxu0 0
    %916 = vmatpush1.bf16.msra.mxu0 0
    %917 = vmatprep.subr.bf16.mxu0 0
    %918 = vmatpush1.bf16.msra.mxu0 0
    %919 = vmatprep.subr.bf16.mxu0 0
    %920 = vmatpush1.bf16.msra.mxu0 0
    %921 = vmatprep.subr.bf16.mxu0 0
    %922 = vmatpush1.bf16.msra.mxu0 0
    %923 = vmatprep.subr.bf16.mxu0 0
    %924 = vmatpush1.bf16.msra.mxu0 0
    %925 = vmatprep.subr.bf16.mxu0 0
    %926 = vmatpush1.bf16.msra.mxu0 0
    %927 = vmatprep.subr.bf16.mxu0 0
    %928 = vmatpush1.bf16.msra.mxu0 0
    %929 = vmatprep.subr.bf16.mxu0 0
    %930 = vmatpush1.bf16.msra.mxu0 0
    %931 = vmatprep.mubr.bf16.mxu0 0
    %932 = vmatmul.mubr.bf16.gmra.mrb[0].mxu0 %v898
    %v933 = vpop.f32.mrb[0].mxu0
    %v934 = vadd.f32 0.0, %v933
    %v935 = vpop.f32.mrb[0].mxu0
    %v936 = vadd.f32 0.0, %v935
    %v937 = vpop.f32.mrb[0].mxu0
    %v938 = vpop.f32.mrb[0].mxu0
    %939 = vdwg.mxu0
    %940 = vmatprep.subr.bf16.mxu0 %v395
    %941 = vmatpush1.bf16.msra.mxu0 %v394
    %942 = vmatprep.subr.bf16.mxu0 %v399
    %943 = vmatpush1.bf16.msra.mxu0 %v398
    %944 = vmatprep.subr.bf16.mxu0 %v403
    %945 = vmatpush1.bf16.msra.mxu0 %v402
    %946 = vmatprep.subr.bf16.mxu0 %v407
    %947 = vmatpush1.bf16.msra.mxu0 %v406
    %948 = vmatprep.subr.bf16.mxu0 %v411
    %949 = vmatpush1.bf16.msra.mxu0 %v410
    %950 = vmatprep.subr.bf16.mxu0 %v415
    %951 = vmatpush1.bf16.msra.mxu0 %v414
    %952 = vmatprep.subr.bf16.mxu0 %v419
    %953 = vmatpush1.bf16.msra.mxu0 %v418
    %954 = vmatprep.subr.bf16.mxu0 %v423
    %955 = vmatpush1.bf16.msra.mxu0 %v422
    %956 = vmatprep.subr.bf16.mxu0 0
    %957 = vmatpush1.bf16.msra.mxu0 0
    %958 = vmatprep.subr.bf16.mxu0 0
    %959 = vmatpush1.bf16.msra.mxu0 0
    %960 = vmatprep.subr.bf16.mxu0 0
    %961 = vmatpush1.bf16.msra.mxu0 0
    %962 = vmatprep.subr.bf16.mxu0 0
    %963 = vmatpush1.bf16.msra.mxu0 0
    %964 = vmatprep.subr.bf16.mxu0 0
    %965 = vmatpush1.bf16.msra.mxu0 0
    %966 = vmatprep.subr.bf16.mxu0 0
    %967 = vmatpush1.bf16.msra.mxu0 0
    %968 = vmatprep.subr.bf16.mxu0 0
    %969 = vmatpush1.bf16.msra.mxu0 0
    %970 = vmatprep.subr.bf16.mxu0 0
    %971 = vmatpush1.bf16.msra.mxu0 0
    %972 = vmatprep.mubr.bf16.mxu0 0
    %973 = vmatmul.mubr.bf16.gmra.mrb[0].mxu0 %v898
    %v974 = vpop.f32.mrb[0].mxu0
    %v975 = vadd.f32 0.0, %v974
    %v976 = vpop.f32.mrb[0].mxu0
    %v977 = vadd.f32 0.0, %v976
    %v978 = vpop.f32.mrb[0].mxu0
    %v979 = vpop.f32.mrb[0].mxu0
    %980 = vdwg.mxu0
    %v981 = vadd.f32 %v237, %v934
    %v982 = vadd.f32 %v239, %v936
    %v983 = vadd.f32 %v310, %v975
    %v984 = vadd.f32 %v312, %v977
    %v985 = vxor.u32 %v981, 2147483648
    %v986 = vxor.u32 %v982, 2147483648
    %v987 = vxor.u32 %v983, 2147483648
    %v988 = vxor.u32 %v984, 2147483648
    %v989 = vmul.f32 %v985, 1.442695
    %v990 = vpow.pop %v989
    %v991 = vmul.f32 %v986, 1.442695
    %v992 = vpow.pop %v991
    %v993 = vmul.f32 %v987, 1.442695
    %v994 = vpow.pop %v993
    %v995 = vmul.f32 %v988, 1.442695
    %v996 = vpow.pop %v995
    %v997 = vadd.f32 %v990, 1.0
    %v998 = vadd.f32 %v992, 1.0
    %v999 = vadd.f32 %v994, 1.0
    %v1000 = vadd.f32 %v996, 1.0
    %v1001 = vrcp.pop %v997
    %v1002 = vmul.f32 1.0, %v1001
    %v1003 = vrcp.pop %v998
    %v1004 = vmul.f32 1.0, %v1003
    %v1005 = vrcp.pop %v999
    %v1006 = vmul.f32 1.0, %v1005
    %v1007 = vrcp.pop %v1000
    %v1008 = vmul.f32 1.0, %v1007
    %v1009 = vmul.f32 %v1008, 2.0
    %v1010 = vsub.f32 %v1009, 1.0
    %v1011 = vmul.f32 %v1004, %v895
    %v1012 = vmul.f32 %v1002, %v1010
    %v1013 = vadd.f32 %v1011, %v1012
    %v1014 = vtanh.pop %v1013
    %v1015 = vmul.f32 %v1006, %v1014
    %v1016 = vpack.c.bf16 %v1015, %v1015
    %1017 = vmatprep.subr.bf16.mxu0 %v393
    %1018 = vmatpush1.bf16.msra.mxu0 %v392
    %1019 = vmatprep.subr.bf16.mxu0 %v397
    %1020 = vmatpush1.bf16.msra.mxu0 %v396
    %1021 = vmatprep.subr.bf16.mxu0 %v401
    %1022 = vmatpush1.bf16.msra.mxu0 %v400
    %1023 = vmatprep.subr.bf16.mxu0 %v405
    %1024 = vmatpush1.bf16.msra.mxu0 %v404
    %1025 = vmatprep.subr.bf16.mxu0 %v409
    %1026 = vmatpush1.bf16.msra.mxu0 %v408
    %1027 = vmatprep.subr.bf16.mxu0 %v413
    %1028 = vmatpush1.bf16.msra.mxu0 %v412
    %1029 = vmatprep.subr.bf16.mxu0 %v417
    %1030 = vmatpush1.bf16.msra.mxu0 %v416
    %1031 = vmatprep.subr.bf16.mxu0 %v421
    %1032 = vmatpush1.bf16.msra.mxu0 %v420
    %1033 = vmatprep.subr.bf16.mxu0 0
    %1034 = vmatpush1.bf16.msra.mxu0 0
    %1035 = vmatprep.subr.bf16.mxu0 0
    %1036 = vmatpush1.bf16.msra.mxu0 0
    %1037 = vmatprep.subr.bf16.mxu0 0
    %1038 = vmatpush1.bf16.msra.mxu0 0
    %1039 = vmatprep.subr.bf16.mxu0 0
    %1040 = vmatpush1.bf16.msra.mxu0 0
    %1041 = vmatprep.subr.bf16.mxu0 0
    %1042 = vmatpush1.bf16.msra.mxu0 0
    %1043 = vmatprep.subr.bf16.mxu0 0
    %1044 = vmatpush1.bf16.msra.mxu0 0
    %1045 = vmatprep.subr.bf16.mxu0 0
    %1046 = vmatpush1.bf16.msra.mxu0 0
    %1047 = vmatprep.subr.bf16.mxu0 0
    %1048 = vmatpush1.bf16.msra.mxu0 0
    %1049 = vmatprep.mubr.bf16.mxu0 0
    %1050 = vmatmul.mubr.bf16.gmra.mrb[0].mxu0 %v1016
    %v1051 = vpop.f32.mrb[0].mxu0
    %v1052 = vadd.f32 0.0, %v1051
    %v1053 = vpop.f32.mrb[0].mxu0
    %v1054 = vadd.f32 0.0, %v1053
    %v1055 = vpop.f32.mrb[0].mxu0
    %v1056 = vpop.f32.mrb[0].mxu0
    %1057 = vdwg.mxu0
    %1058 = vmatprep.subr.bf16.mxu0 %v395
    %1059 = vmatpush1.bf16.msra.mxu0 %v394
    %1060 = vmatprep.subr.bf16.mxu0 %v399
    %1061 = vmatpush1.bf16.msra.mxu0 %v398
    %1062 = vmatprep.subr.bf16.mxu0 %v403
    %1063 = vmatpush1.bf16.msra.mxu0 %v402
    %1064 = vmatprep.subr.bf16.mxu0 %v407
    %1065 = vmatpush1.bf16.msra.mxu0 %v406
    %1066 = vmatprep.subr.bf16.mxu0 %v411
    %1067 = vmatpush1.bf16.msra.mxu0 %v410
    %1068 = vmatprep.subr.bf16.mxu0 %v415
    %1069 = vmatpush1.bf16.msra.mxu0 %v414
    %1070 = vmatprep.subr.bf16.mxu0 %v419
    %1071 = vmatpush1.bf16.msra.mxu0 %v418
    %1072 = vmatprep.subr.bf16.mxu0 %v423
    %1073 = vmatpush1.bf16.msra.mxu0 %v422
    %1074 = vmatprep.subr.bf16.mxu0 0
    %1075 = vmatpush1.bf16.msra.mxu0 0
    %1076 = vmatprep.subr.bf16.mxu0 0
    %1077 = vmatpush1.bf16.msra.mxu0 0
    %1078 = vmatprep.subr.bf16.mxu0 0
    %1079 = vmatpush1.bf16.msra.mxu0 0
    %1080 = vmatprep.subr.bf16.mxu0 0
    %1081 = vmatpush1.bf16.msra.mxu0 0
    %1082 = vmatprep.subr.bf16.mxu0 0
    %1083 = vmatpush1.bf16.msra.mxu0 0
    %1084 = vmatprep.subr.bf16.mxu0 0
    %1085 = vmatpush1.bf16.msra.mxu0 0
    %1086 = vmatprep.subr.bf16.mxu0 0
    %1087 = vmatpush1.bf16.msra.mxu0 0
    %1088 = vmatprep.subr.bf16.mxu0 0
    %1089 = vmatpush1.bf16.msra.mxu0 0
    %1090 = vmatprep.mubr.bf16.mxu0 0
    %1091 = vmatmul.mubr.bf16.gmra.mrb[0].mxu0 %v1016
    %v1092 = vpop.f32.mrb[0].mxu0
    %v1093 = vadd.f32 0.0, %v1092
    %v1094 = vpop.f32.mrb[0].mxu0
    %v1095 = vadd.f32 0.0, %v1094
    %v1096 = vpop.f32.mrb[0].mxu0
    %v1097 = vpop.f32.mrb[0].mxu0
    %1098 = vdwg.mxu0
    %v1099 = vadd.f32 %v241, %v1052
    %v1100 = vadd.f32 %v243, %v1054
    %v1101 = vadd.f32 %v314, %v1093
    %v1102 = vadd.f32 %v316, %v1095
    %v1103 = vxor.u32 %v1099, 2147483648
    %v1104 = vxor.u32 %v1100, 2147483648
    %v1105 = vxor.u32 %v1101, 2147483648
    %v1106 = vxor.u32 %v1102, 2147483648
    %v1107 = vmul.f32 %v1103, 1.442695
    %v1108 = vpow.pop %v1107
    %v1109 = vmul.f32 %v1104, 1.442695
    %v1110 = vpow.pop %v1109
    %v1111 = vmul.f32 %v1105, 1.442695
    %v1112 = vpow.pop %v1111
    %v1113 = vmul.f32 %v1106, 1.442695
    %v1114 = vpow.pop %v1113
    %v1115 = vadd.f32 %v1108, 1.0
    %v1116 = vadd.f32 %v1110, 1.0
    %v1117 = vadd.f32 %v1112, 1.0
    %v1118 = vadd.f32 %v1114, 1.0
    %v1119 = vrcp.pop %v1115
    %v1120 = vmul.f32 1.0, %v1119
    %v1121 = vrcp.pop %v1116
    %v1122 = vmul.f32 1.0, %v1121
    %v1123 = vrcp.pop %v1117
    %v1124 = vmul.f32 1.0, %v1123
    %v1125 = vrcp.pop %v1118
    %v1126 = vmul.f32 1.0, %v1125
    %v1127 = vmul.f32 %v1126, 2.0
    %v1128 = vsub.f32 %v1127, 1.0
    %v1129 = vmul.f32 %v1122, %v1013
    %v1130 = vmul.f32 %v1120, %v1128
    %v1131 = vadd.f32 %v1129, %v1130
    %v1132 = vtanh.pop %v1131
    %v1133 = vmul.f32 %v1124, %v1132
    %v1134 = vpack.c.bf16 %v1133, %v1133
    %1135 = vmatprep.subr.bf16.mxu0 %v393
    %1136 = vmatpush1.bf16.msra.mxu0 %v392
    %1137 = vmatprep.subr.bf16.mxu0 %v397
    %1138 = vmatpush1.bf16.msra.mxu0 %v396
    %1139 = vmatprep.subr.bf16.mxu0 %v401
    %1140 = vmatpush1.bf16.msra.mxu0 %v400
    %1141 = vmatprep.subr.bf16.mxu0 %v405
    %1142 = vmatpush1.bf16.msra.mxu0 %v404
    %1143 = vmatprep.subr.bf16.mxu0 %v409
    %1144 = vmatpush1.bf16.msra.mxu0 %v408
    %1145 = vmatprep.subr.bf16.mxu0 %v413
    %1146 = vmatpush1.bf16.msra.mxu0 %v412
    %1147 = vmatprep.subr.bf16.mxu0 %v417
    %1148 = vmatpush1.bf16.msra.mxu0 %v416
    %1149 = vmatprep.subr.bf16.mxu0 %v421
    %1150 = vmatpush1.bf16.msra.mxu0 %v420
    %1151 = vmatprep.subr.bf16.mxu0 0
    %1152 = vmatpush1.bf16.msra.mxu0 0
    %1153 = vmatprep.subr.bf16.mxu0 0
    %1154 = vmatpush1.bf16.msra.mxu0 0
    %1155 = vmatprep.subr.bf16.mxu0 0
    %1156 = vmatpush1.bf16.msra.mxu0 0
    %1157 = vmatprep.subr.bf16.mxu0 0
    %1158 = vmatpush1.bf16.msra.mxu0 0
    %1159 = vmatprep.subr.bf16.mxu0 0
    %1160 = vmatpush1.bf16.msra.mxu0 0
    %1161 = vmatprep.subr.bf16.mxu0 0
    %1162 = vmatpush1.bf16.msra.mxu0 0
    %1163 = vmatprep.subr.bf16.mxu0 0
    %1164 = vmatpush1.bf16.msra.mxu0 0
    %1165 = vmatprep.subr.bf16.mxu0 0
    %1166 = vmatpush1.bf16.msra.mxu0 0
    %1167 = vmatprep.mubr.bf16.mxu0 0
    %1168 = vmatmul.mubr.bf16.gmra.mrb[0].mxu0 %v1134
    %v1169 = vpop.f32.mrb[0].mxu0
    %v1170 = vadd.f32 0.0, %v1169
    %v1171 = vpop.f32.mrb[0].mxu0
    %v1172 = vadd.f32 0.0, %v1171
    %v1173 = vpop.f32.mrb[0].mxu0
    %v1174 = vpop.f32.mrb[0].mxu0
    %1175 = vdwg.mxu0
    %1176 = vmatprep.subr.bf16.mxu0 %v395
    %1177 = vmatpush1.bf16.msra.mxu0 %v394
    %1178 = vmatprep.subr.bf16.mxu0 %v399
    %1179 = vmatpush1.bf16.msra.mxu0 %v398
    %1180 = vmatprep.subr.bf16.mxu0 %v403
    %1181 = vmatpush1.bf16.msra.mxu0 %v402
    %1182 = vmatprep.subr.bf16.mxu0 %v407
    %1183 = vmatpush1.bf16.msra.mxu0 %v406
    %1184 = vmatprep.subr.bf16.mxu0 %v411
    %1185 = vmatpush1.bf16.msra.mxu0 %v410
    %1186 = vmatprep.subr.bf16.mxu0 %v415
    %1187 = vmatpush1.bf16.msra.mxu0 %v414
    %1188 = vmatprep.subr.bf16.mxu0 %v419
    %1189 = vmatpush1.bf16.msra.mxu0 %v418
    %1190 = vmatprep.subr.bf16.mxu0 %v423
    %1191 = vmatpush1.bf16.msra.mxu0 %v422
    %1192 = vmatprep.subr.bf16.mxu0 0
    %1193 = vmatpush1.bf16.msra.mxu0 0
    %1194 = vmatprep.subr.bf16.mxu0 0
    %1195 = vmatpush1.bf16.msra.mxu0 0
    %1196 = vmatprep.subr.bf16.mxu0 0
    %1197 = vmatpush1.bf16.msra.mxu0 0
    %1198 = vmatprep.subr.bf16.mxu0 0
    %1199 = vmatpush1.bf16.msra.mxu0 0
    %1200 = vmatprep.subr.bf16.mxu0 0
    %1201 = vmatpush1.bf16.msra.mxu0 0
    %1202 = vmatprep.subr.bf16.mxu0 0
    %1203 = vmatpush1.bf16.msra.mxu0 0
    %1204 = vmatprep.subr.bf16.mxu0 0
    %1205 = vmatpush1.bf16.msra.mxu0 0
    %1206 = vmatprep.subr.bf16.mxu0 0
    %1207 = vmatpush1.bf16.msra.mxu0 0
    %1208 = vmatprep.mubr.bf16.mxu0 0
    %1209 = vmatmul.mubr.bf16.gmra.mrb[0].mxu0 %v1134
    %v1210 = vpop.f32.mrb[0].mxu0
    %v1211 = vadd.f32 0.0, %v1210
    %v1212 = vpop.f32.mrb[0].mxu0
    %v1213 = vadd.f32 0.0, %v1212
    %v1214 = vpop.f32.mrb[0].mxu0
    %v1215 = vpop.f32.mrb[0].mxu0
    %1216 = vdwg.mxu0
    %v1217 = vadd.f32 %v247, %v1170
    %v1218 = vadd.f32 %v249, %v1172
    %v1219 = vadd.f32 %v320, %v1211
    %v1220 = vadd.f32 %v322, %v1213
    %v1221 = vxor.u32 %v1217, 2147483648
    %v1222 = vxor.u32 %v1218, 2147483648
    %v1223 = vxor.u32 %v1219, 2147483648
    %v1224 = vxor.u32 %v1220, 2147483648
    %v1225 = vmul.f32 %v1221, 1.442695
    %v1226 = vpow.pop %v1225
    %v1227 = vmul.f32 %v1222, 1.442695
    %v1228 = vpow.pop %v1227
    %v1229 = vmul.f32 %v1223, 1.442695
    %v1230 = vpow.pop %v1229
    %v1231 = vmul.f32 %v1224, 1.442695
    %v1232 = vpow.pop %v1231
    %v1233 = vadd.f32 %v1226, 1.0
    %v1234 = vadd.f32 %v1228, 1.0
    %v1235 = vadd.f32 %v1230, 1.0
    %v1236 = vadd.f32 %v1232, 1.0
    %v1237 = vrcp.pop %v1233
    %v1238 = vmul.f32 1.0, %v1237
    %v1239 = vrcp.pop %v1234
    %v1240 = vmul.f32 1.0, %v1239
    %v1241 = vrcp.pop %v1235
    %v1242 = vmul.f32 1.0, %v1241
    %v1243 = vrcp.pop %v1236
    %v1244 = vmul.f32 1.0, %v1243
    %v1245 = vmul.f32 %v1244, 2.0
    %v1246 = vsub.f32 %v1245, 1.0
    %v1247 = vmul.f32 %v1240, %v1131
    %v1248 = vmul.f32 %v1238, %v1246
    %v1249 = vadd.f32 %v1247, %v1248
    %v1250 = vtanh.pop %v1249
    %v1251 = vmul.f32 %v1242, %v1250
    %v1252 = vpack.c.bf16 %v1251, %v1251
    %1253 = vmatprep.subr.bf16.mxu0 %v393
    %1254 = vmatpush1.bf16.msra.mxu0 %v392
    %1255 = vmatprep.subr.bf16.mxu0 %v397
    %1256 = vmatpush1.bf16.msra.mxu0 %v396
    %1257 = vmatprep.subr.bf16.mxu0 %v401
    %1258 = vmatpush1.bf16.msra.mxu0 %v400
    %1259 = vmatprep.subr.bf16.mxu0 %v405
    %1260 = vmatpush1.bf16.msra.mxu0 %v404
    %1261 = vmatprep.subr.bf16.mxu0 %v409
    %1262 = vmatpush1.bf16.msra.mxu0 %v408
    %1263 = vmatprep.subr.bf16.mxu0 %v413
    %1264 = vmatpush1.bf16.msra.mxu0 %v412
    %1265 = vmatprep.subr.bf16.mxu0 %v417
    %1266 = vmatpush1.bf16.msra.mxu0 %v416
    %1267 = vmatprep.subr.bf16.mxu0 %v421
    %1268 = vmatpush1.bf16.msra.mxu0 %v420
    %1269 = vmatprep.subr.bf16.mxu0 0
    %1270 = vmatpush1.bf16.msra.mxu0 0
    %1271 = vmatprep.subr.bf16.mxu0 0
    %1272 = vmatpush1.bf16.msra.mxu0 0
    %1273 = vmatprep.subr.bf16.mxu0 0
    %1274 = vmatpush1.bf16.msra.mxu0 0
    %1275 = vmatprep.subr.bf16.mxu0 0
    %1276 = vmatpush1.bf16.msra.mxu0 0
    %1277 = vmatprep.subr.bf16.mxu0 0
    %1278 = vmatpush1.bf16.msra.mxu0 0
    %1279 = vmatprep.subr.bf16.mxu0 0
    %1280 = vmatpush1.bf16.msra.mxu0 0
    %1281 = vmatprep.subr.bf16.mxu0 0
    %1282 = vmatpush1.bf16.msra.mxu0 0
    %1283 = vmatprep.subr.bf16.mxu0 0
    %1284 = vmatpush1.bf16.msra.mxu0 0
    %1285 = vmatprep.mubr.bf16.mxu0 0
    %1286 = vmatmul.mubr.bf16.gmra.mrb[0].mxu0 %v1252
    %v1287 = vpop.f32.mrb[0].mxu0
    %v1288 = vadd.f32 0.0, %v1287
    %v1289 = vpop.f32.mrb[0].mxu0
    %v1290 = vadd.f32 0.0, %v1289
    %v1291 = vpop.f32.mrb[0].mxu0
    %v1292 = vpop.f32.mrb[0].mxu0
    %1293 = vdwg.mxu0
    %1294 = vmatprep.subr.bf16.mxu0 %v395
    %1295 = vmatpush1.bf16.msra.mxu0 %v394
    %1296 = vmatprep.subr.bf16.mxu0 %v399
    %1297 = vmatpush1.bf16.msra.mxu0 %v398
    %1298 = vmatprep.subr.bf16.mxu0 %v403
    %1299 = vmatpush1.bf16.msra.mxu0 %v402
    %1300 = vmatprep.subr.bf16.mxu0 %v407
    %1301 = vmatpush1.bf16.msra.mxu0 %v406
    %1302 = vmatprep.subr.bf16.mxu0 %v411
    %1303 = vmatpush1.bf16.msra.mxu0 %v410
    %1304 = vmatprep.subr.bf16.mxu0 %v415
    %1305 = vmatpush1.bf16.msra.mxu0 %v414
    %1306 = vmatprep.subr.bf16.mxu0 %v419
    %1307 = vmatpush1.bf16.msra.mxu0 %v418
    %1308 = vmatprep.subr.bf16.mxu0 %v423
    %1309 = vmatpush1.bf16.msra.mxu0 %v422
    %1310 = vmatprep.subr.bf16.mxu0 0
    %1311 = vmatpush1.bf16.msra.mxu0 0
    %1312 = vmatprep.subr.bf16.mxu0 0
    %1313 = vmatpush1.bf16.msra.mxu0 0
    %1314 = vmatprep.subr.bf16.mxu0 0
    %1315 = vmatpush1.bf16.msra.mxu0 0
    %1316 = vmatprep.subr.bf16.mxu0 0
    %1317 = vmatpush1.bf16.msra.mxu0 0
    %1318 = vmatprep.subr.bf16.mxu0 0
    %1319 = vmatpush1.bf16.msra.mxu0 0
    %1320 = vmatprep.subr.bf16.mxu0 0
    %1321 = vmatpush1.bf16.msra.mxu0 0
    %1322 = vmatprep.subr.bf16.mxu0 0
    %1323 = vmatpush1.bf16.msra.mxu0 0
    %1324 = vmatprep.subr.bf16.mxu0 0
    %1325 = vmatpush1.bf16.msra.mxu0 0
    %1326 = vmatprep.mubr.bf16.mxu0 0
    %1327 = vmatmul.mubr.bf16.gmra.mrb[0].mxu0 %v1252
    %v1328 = vpop.f32.mrb[0].mxu0
    %v1329 = vadd.f32 0.0, %v1328
    %v1330 = vpop.f32.mrb[0].mxu0
    %v1331 = vadd.f32 0.0, %v1330
    %v1332 = vpop.f32.mrb[0].mxu0
    %v1333 = vpop.f32.mrb[0].mxu0
    %1334 = vdwg.mxu0
    %v1335 = vadd.f32 %v251, %v1288
    %v1336 = vadd.f32 %v253, %v1290
    %v1337 = vadd.f32 %v324, %v1329
    %v1338 = vadd.f32 %v326, %v1331
    %v1339 = vxor.u32 %v1335, 2147483648
    %v1340 = vxor.u32 %v1336, 2147483648
    %v1341 = vxor.u32 %v1337, 2147483648
    %v1342 = vxor.u32 %v1338, 2147483648
    %v1343 = vmul.f32 %v1339, 1.442695
    %v1344 = vpow.pop %v1343
    %v1345 = vmul.f32 %v1340, 1.442695
    %v1346 = vpow.pop %v1345
    %v1347 = vmul.f32 %v1341, 1.442695
    %v1348 = vpow.pop %v1347
    %v1349 = vmul.f32 %v1342, 1.442695
    %v1350 = vpow.pop %v1349
    %v1351 = vadd.f32 %v1344, 1.0
    %v1352 = vadd.f32 %v1346, 1.0
    %v1353 = vadd.f32 %v1348, 1.0
    %v1354 = vadd.f32 %v1350, 1.0
    %v1355 = vrcp.pop %v1351
    %v1356 = vmul.f32 1.0, %v1355
    %v1357 = vrcp.pop %v1352
    %v1358 = vmul.f32 1.0, %v1357
    %v1359 = vrcp.pop %v1353
    %v1360 = vmul.f32 1.0, %v1359
    %v1361 = vrcp.pop %v1354
    %v1362 = vmul.f32 1.0, %v1361
    %v1363 = vmul.f32 %v1362, 2.0
    %v1364 = vsub.f32 %v1363, 1.0
    %v1365 = vmul.f32 %v1358, %v1249
    %v1366 = vmul.f32 %v1356, %v1364
    %v1367 = vadd.f32 %v1365, %v1366
    %v1368 = vtanh.pop %v1367
    %v1369 = vmul.f32 %v1360, %v1368
    %v1370 = vld [vmem:[#allocation8 + $0x10] sm:$0xff]
    %v1371 = vld [vmem:[#allocation8 + $0x18] sm:$0xff]
    %v1372 = vld [vmem:[#allocation8 + $0x20] sm:$0xff]
    %v1373 = vld [vmem:[#allocation8 + $0x28] sm:$0xff]
    %v1374 = vld [vmem:[#allocation8 + $0x30] sm:$0xff]
    %v1375 = vld [vmem:[#allocation8 + $0x38] sm:$0xff]
    %v1376 = vld [vmem:[#allocation8 + $0x40] sm:$0xff]
    %v1377 = vld [vmem:[#allocation8 + $0x48] sm:$0xff]
    %v1378 = vld [vmem:[#allocation8 + $0x50] sm:$0xff]
    %v1379 = vld [vmem:[#allocation8 + $0x58] sm:$0xff]
    %v1380 = vld [vmem:[#allocation8 + $0x60] sm:$0xff]
    %v1381 = vld [vmem:[#allocation8 + $0x68] sm:$0xff]
    %v1382 = vld [vmem:[#allocation8 + $0x70] sm:$0xff]
    %v1383 = vld [vmem:[#allocation8 + $0x78] sm:$0xff]
    %v1384 = vld [vmem:[#allocation8 + $0x80] sm:$0xff]
    %v1385 = vld [vmem:[#allocation8 + $0x88] sm:$0xff]
    %v1386 = vld [vmem:[#allocation8 + $0x90] sm:$0xff]
    %v1387 = vld [vmem:[#allocation8 + $0x98] sm:$0xff]
    %v1388 = vld [vmem:[#allocation8 + $0xa0] sm:$0xff]
    %v1389 = vld [vmem:[#allocation8 + $0xa8] sm:$0xff]
    %v1390 = vld [vmem:[#allocation8 + $0xb0] sm:$0xff]
    %v1391 = vld [vmem:[#allocation8 + $0xb8] sm:$0xff]
    %v1392 = vld [vmem:[#allocation8 + $0xc0] sm:$0xff]
    %v1393 = vld [vmem:[#allocation8 + $0xc8] sm:$0xff]
    %v1394 = vld [vmem:[#allocation8 + $0xd0] sm:$0xff]
    %v1395 = vld [vmem:[#allocation8 + $0xd8] sm:$0xff]
    %v1396 = vld [vmem:[#allocation8 + $0xe0] sm:$0xff]
    %v1397 = vld [vmem:[#allocation8 + $0xe8] sm:$0xff]
    %v1398 = vld [vmem:[#allocation8 + $0xf0] sm:$0xff]
    %v1399 = vld [vmem:[#allocation8 + $0xf8] sm:$0xff]
    %v1400 = vld [vmem:[#allocation8 + $0x100] sm:$0xff]
    %v1401 = vld [vmem:[#allocation8 + $0x108] sm:$0xff]
    %v1402 = vld [vmem:[#allocation8 + $0x110] sm:$0x1]
    %v1403 = vld [vmem:[#allocation8 + $0x111] sm:$0x1]
    %v1404 = vlaneseq
    %v1405 = vshrl.u32 %v1404, 7
    %v1406 = vsub.s32 0, %v1405
    %v1407 = vrot.slane %v1402, %v1406
    %1408 = vmatprep.subr.mxu0 0.0
    %1409 = vmatpush1.msra.mxu0 %v1370
    %1410 = vmatprep.subr.mxu0 0.0
    %1411 = vmatpush1.msra.mxu0 %v1371
    %1412 = vmatprep.subr.mxu0 0.0
    %1413 = vmatpush1.msra.mxu0 %v1372
    %1414 = vmatprep.subr.mxu0 0.0
    %1415 = vmatpush1.msra.mxu0 %v1373
    %1416 = vmatprep.subr.mxu0 0.0
    %1417 = vmatpush1.msra.mxu0 %v1374
    %1418 = vmatprep.subr.mxu0 0.0
    %1419 = vmatpush1.msra.mxu0 %v1375
    %1420 = vmatprep.subr.mxu0 0.0
    %1421 = vmatpush1.msra.mxu0 %v1376
    %1422 = vmatprep.subr.mxu0 0.0
    %1423 = vmatpush1.msra.mxu0 %v1377
    %1424 = vmatprep.subr.mxu0 0.0
    %1425 = vmatpush1.msra.mxu0 %v1378
    %1426 = vmatprep.subr.mxu0 0.0
    %1427 = vmatpush1.msra.mxu0 %v1379
    %1428 = vmatprep.subr.mxu0 0.0
    %1429 = vmatpush1.msra.mxu0 %v1380
    %1430 = vmatprep.subr.mxu0 0.0
    %1431 = vmatpush1.msra.mxu0 %v1381
    %1432 = vmatprep.subr.mxu0 0.0
    %1433 = vmatpush1.msra.mxu0 %v1382
    %1434 = vmatprep.subr.mxu0 0.0
    %1435 = vmatpush1.msra.mxu0 %v1383
    %1436 = vmatprep.subr.mxu0 0.0
    %1437 = vmatpush1.msra.mxu0 %v1384
    %1438 = vmatprep.subr.mxu0 0.0
    %1439 = vmatpush1.msra.mxu0 %v1385
    %1440 = vmatprep.subr.mxu0 0.0
    %1441 = vmatpush1.msra.mxu0 0.0
    %1442 = vmatprep.subr.mxu0 0.0
    %1443 = vmatpush1.msra.mxu0 0.0
    %1444 = vmatprep.subr.mxu0 0.0
    %1445 = vmatpush1.msra.mxu0 0.0
    %1446 = vmatprep.subr.mxu0 0.0
    %1447 = vmatpush1.msra.mxu0 0.0
    %1448 = vmatprep.subr.mxu0 0.0
    %1449 = vmatpush1.msra.mxu0 0.0
    %1450 = vmatprep.subr.mxu0 0.0
    %1451 = vmatpush1.msra.mxu0 0.0
    %1452 = vmatprep.subr.mxu0 0.0
    %1453 = vmatpush1.msra.mxu0 0.0
    %1454 = vmatprep.subr.mxu0 0.0
    %1455 = vmatpush1.msra.mxu0 0.0
    %1456 = vmatprep.subr.mxu0 0.0
    %1457 = vmatpush1.msra.mxu0 0.0
    %1458 = vmatprep.subr.mxu0 0.0
    %1459 = vmatpush1.msra.mxu0 0.0
    %1460 = vmatprep.subr.mxu0 0.0
    %1461 = vmatpush1.msra.mxu0 0.0
    %1462 = vmatprep.subr.mxu0 0.0
    %1463 = vmatpush1.msra.mxu0 0.0
    %1464 = vmatprep.subr.mxu0 0.0
    %1465 = vmatpush1.msra.mxu0 0.0
    %1466 = vmatprep.subr.mxu0 0.0
    %1467 = vmatpush1.msra.mxu0 0.0
    %1468 = vmatprep.subr.mxu0 0.0
    %1469 = vmatpush1.msra.mxu0 0.0
    %1470 = vmatprep.subr.mxu0 0.0
    %1471 = vmatpush1.msra.mxu0 0.0
    %1472 = vmatprep.mubr.f32.mxu0 0.0
    %1473 = vmatmul.mubr.f32.gmra.mrb[0].mxu0 %v1369
    %v1474 = vpop.f32.mrb[0].mxu0
    %v1475 = vadd.f32 %v1407, %v1474
    %v1476 = vpop.f32.mrb[0].mxu0
    %1477 = vdwg.mxu0
    %v1478 = vmax.f32 %v1475, 0.0
    %v1479 = vlaneseq
    %v1480 = vshrl.u32 %v1479, 7
    %v1481 = vsub.s32 0, %v1480
    %v1482 = vrot.slane %v1403, %v1481
    %1483 = vmatprep.subr.mxu0 0.0
    %1484 = vmatpush1.msra.mxu0 %v1386
    %1485 = vmatprep.subr.mxu0 0.0
    %1486 = vmatpush1.msra.mxu0 %v1387
    %1487 = vmatprep.subr.mxu0 0.0
    %1488 = vmatpush1.msra.mxu0 %v1388
    %1489 = vmatprep.subr.mxu0 0.0
    %1490 = vmatpush1.msra.mxu0 %v1389
    %1491 = vmatprep.subr.mxu0 0.0
    %1492 = vmatpush1.msra.mxu0 %v1390
    %1493 = vmatprep.subr.mxu0 0.0
    %1494 = vmatpush1.msra.mxu0 %v1391
    %1495 = vmatprep.subr.mxu0 0.0
    %1496 = vmatpush1.msra.mxu0 %v1392
    %1497 = vmatprep.subr.mxu0 0.0
    %1498 = vmatpush1.msra.mxu0 %v1393
    %1499 = vmatprep.subr.mxu0 0.0
    %1500 = vmatpush1.msra.mxu0 %v1394
    %1501 = vmatprep.subr.mxu0 0.0
    %1502 = vmatpush1.msra.mxu0 %v1395
    %1503 = vmatprep.subr.mxu0 0.0
    %1504 = vmatpush1.msra.mxu0 %v1396
    %1505 = vmatprep.subr.mxu0 0.0
    %1506 = vmatpush1.msra.mxu0 %v1397
    %1507 = vmatprep.subr.mxu0 0.0
    %1508 = vmatpush1.msra.mxu0 %v1398
    %1509 = vmatprep.subr.mxu0 0.0
    %1510 = vmatpush1.msra.mxu0 %v1399
    %1511 = vmatprep.subr.mxu0 0.0
    %1512 = vmatpush1.msra.mxu0 %v1400
    %1513 = vmatprep.subr.mxu0 0.0
    %1514 = vmatpush1.msra.mxu0 %v1401
    %1515 = vmatprep.subr.mxu0 0.0
    %1516 = vmatpush1.msra.mxu0 0.0
    %1517 = vmatprep.subr.mxu0 0.0
    %1518 = vmatpush1.msra.mxu0 0.0
    %1519 = vmatprep.subr.mxu0 0.0
    %1520 = vmatpush1.msra.mxu0 0.0
    %1521 = vmatprep.subr.mxu0 0.0
    %1522 = vmatpush1.msra.mxu0 0.0
    %1523 = vmatprep.subr.mxu0 0.0
    %1524 = vmatpush1.msra.mxu0 0.0
    %1525 = vmatprep.subr.mxu0 0.0
    %1526 = vmatpush1.msra.mxu0 0.0
    %1527 = vmatprep.subr.mxu0 0.0
    %1528 = vmatpush1.msra.mxu0 0.0
    %1529 = vmatprep.subr.mxu0 0.0
    %1530 = vmatpush1.msra.mxu0 0.0
    %1531 = vmatprep.subr.mxu0 0.0
    %1532 = vmatpush1.msra.mxu0 0.0
    %1533 = vmatprep.subr.mxu0 0.0
    %1534 = vmatpush1.msra.mxu0 0.0
    %1535 = vmatprep.subr.mxu0 0.0
    %1536 = vmatpush1.msra.mxu0 0.0
    %1537 = vmatprep.subr.mxu0 0.0
    %1538 = vmatpush1.msra.mxu0 0.0
    %1539 = vmatprep.subr.mxu0 0.0
    %1540 = vmatpush1.msra.mxu0 0.0
    %1541 = vmatprep.subr.mxu0 0.0
    %1542 = vmatpush1.msra.mxu0 0.0
    %1543 = vmatprep.subr.mxu0 0.0
    %1544 = vmatpush1.msra.mxu0 0.0
    %1545 = vmatprep.subr.mxu0 0.0
    %1546 = vmatpush1.msra.mxu0 0.0
    %1547 = vmatprep.mubr.f32.mxu0 0.0
    %1548 = vmatmul.mubr.f32.gmra.mrb[0].mxu0 %v1478
    %v1549 = vpop.f32.mrb[0].mxu0
    %v1550 = vadd.f32 %v1482, %v1549
    %v1551 = vpop.f32.mrb[0].mxu0
    %1552 = vdwg.mxu0
    %1553 = vst [vmem:[#allocation10] sm:$0xff] %v1550
    // Predicated region
    $region34: #{tpu_custom_call.1} parent=1 // pred_check
      _
    $region35: #{tpu_custom_call.1} parent=1 // pred_check_branch
      %1555 = sbr.rel (0) target = $region37
    $region36: #{tpu_custom_call.1} parent=1 // pred_region
      %s1557 = ssub.s32 128, 128
      %1558 = vsyncadd [#allocation4], %s1557
      %s1560 = sshll.u32 [#allocation10], 4
      %s1561 = int_to_ptr.vmem [resolvable:$true] %s1560
      %1563 = dma.vmem_to_hbm [thread:$0]  %s1561, 128, %s4, [#allocation4]
    $region37: #{tpu_custom_call.1} parent=1 // pred_fallthru
      _
    // Predicated region
    $region38: #{tpu_custom_call.1} parent=1 // pred_check
      _
    $region39: #{tpu_custom_call.1} parent=1 // pred_check_branch
      %1565 = sbr.rel (0) target = $region41
    $region40: #{tpu_custom_call.1} parent=1 // pred_region
      %1566 = dma.done [#allocation4], 128
    $region41: #{tpu_custom_call.1} parent=1 // pred_fallthru
      _
    %1567 = vsyncpa [#allocation3], 1
    %1568 = vsyncpa [#allocation6], 1
    %1569 = vsyncpa [#allocation9], 1
    %1570 = vsyncpa [#allocation4], 1

</llo_original>
